<compile_context>
chip_gen: v5e
topology: v5e:2x2
jax: 0.10.0
libtpu: 0.0.40
codegen_flags: <defaults>
</compile_context>

<pallas_src>
import math

import numpy as np

import jax
import jax.numpy as jnp
from jax.experimental import pallas as pl
from jax.experimental.pallas import tpu as pltpu

# --- config (small shapes consistent with the module) ---
B, S, H = 2, 8, 32          # batch, sequence, hidden_size
NUM_HEADS = 4
HEAD_DIM = H // NUM_HEADS
MLP_DIM = 64                # config.transformer['mlp_dim']
NUM_LAYERS = 2              # config.transformer['num_layers']
EPS = 1e-6
BS = B * S
CH = 3 * HEAD_DIM           # per-head [q|k|v] chunk width in the fused QKV output (24)

# --- weight-slab row layout: everything packed into ONE (SLAB_ROWS, 96) f32 array ---
R_WQKV = 0                          # rows [0, 32)   : fused QKV weight, 96 cols (head-grouped)
R_WO = H                            # rows [32, 64)  : Wo, 32 cols
R_W1 = 2 * H                        # rows [64, 96)  : W1, 64 cols
R_W2 = 3 * H                        # rows [96, 160) : W2, 32 cols
R_VEC = 3 * H + MLP_DIM             # rows [160,168) : bqkv / [ln1g|ln1b|bo] / [ln2g|ln2b|b2] / b1 / pad
ROWS_PER_LAYER = R_VEC + 8          # 168 (multiple of 8 -> all matrix starts sublane-aligned)
R_ENC = NUM_LAYERS * ROWS_PER_LAYER  # encoder_norm row: [gamma | beta | pad]
SLAB_ROWS = R_ENC + 8               # 344
SLAB_COLS = 3 * H                   # 96


# ---------------------------------------------------------------- helpers ----
def _layernorm(x, gamma, beta):
    mu = jnp.mean(x, axis=-1, keepdims=True)
    var = jnp.mean(jnp.square(x - mu), axis=-1, keepdims=True)
    return (x - mu) * jax.lax.rsqrt(var + EPS) * gamma + beta


def _gelu(x):
    c = math.sqrt(2.0 / math.pi)
    return 0.5 * x * (1.0 + jnp.tanh(c * (x + 0.044715 * x * x * x)))


# ------------------------------------------------------------------ kernel ---
def encoder_kernel(x_ref,        # (B*S, H)            activation
                   w_ref,        # (SLAB_ROWS, 96)     packed weight slab
                   o_ref):       # (B*S, H)
    x = x_ref[...]               # (BS, H) float32
    scale = 1.0 / math.sqrt(HEAD_DIM)

    for l in range(NUM_LAYERS):                       # static unrolled layer loop
        base = l * ROWS_PER_LAYER
        wqkv = w_ref[base + R_WQKV: base + R_WQKV + H, :]          # (H, 3H) head-grouped
        wo = w_ref[base + R_WO: base + R_WO + H, 0:H]              # (H, H)
        w1 = w_ref[base + R_W1: base + R_W1 + H, 0:MLP_DIM]        # (H, MLP)
        w2 = w_ref[base + R_W2: base + R_W2 + MLP_DIM, 0:H]        # (MLP, H)
        vecs = w_ref[base + R_VEC: base + R_VEC + 8, :]            # (8, 96) aligned load
        bqkv = vecs[0:1, :]                                        # (1, 3H) head-grouped
        ln1g, ln1b, bo = vecs[1:2, 0:H], vecs[1:2, H:2 * H], vecs[1:2, 2 * H:3 * H]
        ln2g, ln2b, b2 = vecs[2:3, 0:H], vecs[2:3, H:2 * H], vecs[2:3, 2 * H:3 * H]
        b1 = vecs[3:4, 0:MLP_DIM]                                  # (1, MLP)

        # ---- attention_norm + multi-head self-attention + residual ----
        res = x
        xn = _layernorm(x, ln1g, ln1b)
        # fused QKV projection; output lanes grouped per head as [q_h | k_h | v_h] (24 each)
        qkv = jnp.dot(xn, wqkv, preferred_element_type=jnp.float32) + bqkv   # (BS, 3H)
        # stack heads into the batch dim: (NUM_HEADS*B, S, 3*HEAD_DIM)
        qkvh = jnp.concatenate(
            [qkv[:, h * CH:(h + 1) * CH].reshape(B, S, CH) for h in range(NUM_HEADS)],
            axis=0)
        qh = qkvh[:, :, 0:HEAD_DIM]
        kh = qkvh[:, :, HEAD_DIM:2 * HEAD_DIM]
        vh = qkvh[:, :, 2 * HEAD_DIM:CH]
        # one batched score/softmax/context over all (head, batch) pairs
        s = jnp.einsum('bqd,bkd->bqk', qh, kh,
                       preferred_element_type=jnp.float32) * scale           # (NH*B, S, S)
        s = s - jnp.max(s, axis=-1, keepdims=True)                           # stable softmax
        p = jnp.exp(s)
        p = p / jnp.sum(p, axis=-1, keepdims=True)                           # exact divide
        ctx = jnp.einsum('bqk,bkd->bqd', p, vh,
                         preferred_element_type=jnp.float32)                 # (NH*B, S, HD)
        # reassemble heads along lanes and apply ONE output projection
        ctx2 = jnp.concatenate(
            [ctx[h * B:(h + 1) * B].reshape(BS, HEAD_DIM) for h in range(NUM_HEADS)],
            axis=1)                                                          # (BS, H)
        x = jnp.dot(ctx2, wo, preferred_element_type=jnp.float32) + bo + res

        # ---- ffn_norm + MLP + residual ----
        res = x
        xn = _layernorm(x, ln2g, ln2b)
        y = jnp.dot(xn, w1, preferred_element_type=jnp.float32) + b1
        y = _gelu(y)
        y = jnp.dot(y, w2, preferred_element_type=jnp.float32) + b2
        x = y + res

    # ---- final encoder LayerNorm ----
    encn = w_ref[R_ENC: R_ENC + 1, :]
    o_ref[...] = _layernorm(x, encn[:, 0:H], encn[:, H:2 * H]).astype(o_ref.dtype)


# ---------------------------------------------------------------- wrapper ----
def encoder_forward(x, slab):
    x2 = x.reshape(BS, H)
    out = pl.pallas_call(
        encoder_kernel,
        out_shape=jax.ShapeDtypeStruct((BS, H), x.dtype),
        grid=(1,),
        in_specs=[pl.BlockSpec((BS, H), lambda i: (0, 0)),
                  pl.BlockSpec((SLAB_ROWS, SLAB_COLS), lambda i: (0, 0))],
        out_specs=pl.BlockSpec((BS, H), lambda i: (0, 0)),
        compiler_params=pltpu.CompilerParams(
            dimension_semantics=("arbitrary",)),
    )(x2, slab)
    return out.reshape(B, S, H)


# ------------------------------------------------------ deterministic init ---
def init_params(key):
    def normal(k, shape, scale=0.02):
        return scale * jax.random.normal(k, shape, jnp.float32)

    names = ['wq', 'bq', 'wk', 'bk', 'wv', 'bv', 'wo', 'bo',
             'w1', 'b1', 'w2', 'b2', 'ln1g', 'ln1b', 'ln2g', 'ln2b']
    acc = {n: [] for n in names}
    for layer in range(NUM_LAYERS):
        ks = jax.random.split(jax.random.fold_in(key, layer), 12)
        acc['wq'].append(normal(ks[0], (H, H)));   acc['bq'].append(normal(ks[1], (H,)))
        acc['wk'].append(normal(ks[2], (H, H)));   acc['bk'].append(normal(ks[3], (H,)))
        acc['wv'].append(normal(ks[4], (H, H)));   acc['bv'].append(normal(ks[5], (H,)))
        acc['wo'].append(normal(ks[6], (H, H)));   acc['bo'].append(normal(ks[7], (H,)))
        acc['w1'].append(normal(ks[8], (H, MLP_DIM)));  acc['b1'].append(normal(ks[9], (MLP_DIM,)))
        acc['w2'].append(normal(ks[10], (MLP_DIM, H))); acc['b2'].append(normal(ks[11], (H,)))
        acc['ln1g'].append(jnp.ones((H,), jnp.float32))
        acc['ln1b'].append(jnp.zeros((H,), jnp.float32))
        acc['ln2g'].append(jnp.ones((H,), jnp.float32))
        acc['ln2b'].append(jnp.zeros((H,), jnp.float32))
    params = {k: jnp.stack(v) for k, v in acc.items()}
    params['eng'] = jnp.ones((H,), jnp.float32)
    params['enb'] = jnp.zeros((H,), jnp.float32)
    return params


def _group_qkv_by_head(wq, wk, wv):
    """Concatenate Q/K/V columns so each head's [q|k|v] is a contiguous 24-lane chunk."""
    cols = []
    for h in range(NUM_HEADS):
        sl = slice(h * HEAD_DIM, (h + 1) * HEAD_DIM)
        cols += [wq[..., sl], wk[..., sl], wv[..., sl]]
    return jnp.concatenate(cols, axis=-1)


def pack_params(params):
    """Pack all per-layer weights + encoder_norm into one (SLAB_ROWS, 96) f32 slab."""
    slab = np.zeros((SLAB_ROWS, SLAB_COLS), np.float32)
    for l in range(NUM_LAYERS):
        base = l * ROWS_PER_LAYER
        wqkv = np.asarray(_group_qkv_by_head(params['wq'][l], params['wk'][l], params['wv'][l]))
        bqkv = np.asarray(_group_qkv_by_head(params['bq'][l], params['bk'][l], params['bv'][l]))
        slab[base + R_WQKV: base + R_WQKV + H, :] = wqkv
        slab[base + R_WO: base + R_WO + H, 0:H] = np.asarray(params['wo'][l])
        slab[base + R_W1: base + R_W1 + H, 0:MLP_DIM] = np.asarray(params['w1'][l])
        slab[base + R_W2: base + R_W2 + MLP_DIM, 0:H] = np.asarray(params['w2'][l])
        slab[base + R_VEC + 0, :] = bqkv
        slab[base + R_VEC + 1, 0:H] = np.asarray(params['ln1g'][l])
        slab[base + R_VEC + 1, H:2 * H] = np.asarray(params['ln1b'][l])
        slab[base + R_VEC + 1, 2 * H:3 * H] = np.asarray(params['bo'][l])
        slab[base + R_VEC + 2, 0:H] = np.asarray(params['ln2g'][l])
        slab[base + R_VEC + 2, H:2 * H] = np.asarray(params['ln2b'][l])
        slab[base + R_VEC + 2, 2 * H:3 * H] = np.asarray(params['b2'][l])
        slab[base + R_VEC + 3, 0:MLP_DIM] = np.asarray(params['b1'][l])
    slab[R_ENC, 0:H] = np.asarray(params['eng'])
    slab[R_ENC, H:2 * H] = np.asarray(params['enb'])
    return jnp.asarray(slab)


# ------------------------------------------------------ pure-JAX reference ---
_HI = jax.lax.Precision.HIGHEST   # exact f32 reference matmuls


def _reference(x, params):
    xb = x
    for l in range(NUM_LAYERS):
        h = xb
        xn = _layernorm(xb, params['ln1g'][l], params['ln1b'][l])
        q = jnp.dot(xn, params['wq'][l], precision=_HI) + params['bq'][l]
        k = jnp.dot(xn, params['wk'][l], precision=_HI) + params['bk'][l]
        v = jnp.dot(xn, params['wv'][l], precision=_HI) + params['bv'][l]
        qh = q.reshape(B, S, NUM_HEADS, HEAD_DIM).transpose(0, 2, 1, 3)
        kh = k.reshape(B, S, NUM_HEADS, HEAD_DIM).transpose(0, 2, 1, 3)
        vh = v.reshape(B, S, NUM_HEADS, HEAD_DIM).transpose(0, 2, 1, 3)
        s = jnp.einsum('bhqd,bhkd->bhqk', qh, kh, precision=_HI) / math.sqrt(HEAD_DIM)
        p = jax.nn.softmax(s, axis=-1)
        ctx = jnp.einsum('bhqk,bhkd->bhqd', p, vh, precision=_HI)
        ctx = ctx.transpose(0, 2, 1, 3).reshape(B, S, H)
        xb = jnp.dot(ctx, params['wo'][l], precision=_HI) + params['bo'][l] + h

        h = xb
        xn = _layernorm(xb, params['ln2g'][l], params['ln2b'][l])
        y = _gelu(jnp.dot(xn, params['w1'][l], precision=_HI) + params['b1'][l])
        xb = jnp.dot(y, params['w2'][l], precision=_HI) + params['b2'][l] + h
    return _layernorm(xb, params['eng'], params['enb'])


# --------------------------------------------------------------------- main --
if __name__ == "__main__":
    key = jax.random.PRNGKey(0)
    kx, kp = jax.random.split(key)
    x = jax.random.normal(kx, (B, S, H), jnp.float32)

    params = init_params(kp)
    slab = pack_params(params)

    out = encoder_forward(x, slab)
    out = jax.block_until_ready(out)

    ref = jax.block_until_ready(_reference(x, params))
    assert out.shape == (B, S, H)
    err = float(jnp.max(jnp.abs(out - ref)))
    # Softmax now uses an exact divide (per review), so the only residual error source is
    # matmul precision.  The reference runs at Precision.HIGHEST; the 1e-3 bound leaves
    # margin in case Mosaic lowers the tiny f32 MXU ops via bf16 passes (typical observed
    # error with matched precision is ~1e-6).
    assert err < 1e-3, f"max abs diff {err}"
    print("KERNEL_OK")
</pallas_src>

<mosaic_0001>
module attributes {stable_mosaic.version = 11 : i64} {
  func.func @encoder_kernel(%arg0: i32, %arg1: memref<16x32xf32, #tpu.memory_space<vmem>>, %arg2: memref<344x96xf32, #tpu.memory_space<vmem>>, %arg3: memref<16x32xf32, #tpu.memory_space<vmem>>) attributes {dimension_semantics = [#tpu.dimension_semantics<arbitrary>], iteration_bounds = array<i64: 1>, scalar_prefetch = 0 : i64, scratch_operands = 0 : i64, tpu.core_type = #tpu.core_type<tc>, window_params = [{pipeline_mode = #tpu.pipeline_mode<synchronous>, transform_indices = @transform_0, window_bounds = array<i64: 16, 32>}, {pipeline_mode = #tpu.pipeline_mode<synchronous>, transform_indices = @transform_1, window_bounds = array<i64: 344, 96>}, {pipeline_mode = #tpu.pipeline_mode<synchronous>, transform_indices = @transform_2, window_bounds = array<i64: 16, 32>}]} {
    %c0 = arith.constant 0 : index
    %c0_0 = arith.constant 0 : index
    %0 = vector.load %arg1[%c0, %c0_0] : memref<16x32xf32, #tpu.memory_space<vmem>>, vector<16x32xf32>
    %c0_1 = arith.constant 0 : index
    %c0_2 = arith.constant 0 : index
    %1 = vector.load %arg2[%c0_1, %c0_2] : memref<344x96xf32, #tpu.memory_space<vmem>>, vector<32x96xf32>
    %c32 = arith.constant 32 : index
    %c0_3 = arith.constant 0 : index
    %2 = vector.load %arg2[%c32, %c0_3] : memref<344x96xf32, #tpu.memory_space<vmem>>, vector<32x32xf32>
    %c64 = arith.constant 64 : index
    %c0_4 = arith.constant 0 : index
    %3 = vector.load %arg2[%c64, %c0_4] : memref<344x96xf32, #tpu.memory_space<vmem>>, vector<32x64xf32>
    %c96 = arith.constant 96 : index
    %c0_5 = arith.constant 0 : index
    %4 = vector.load %arg2[%c96, %c0_5] : memref<344x96xf32, #tpu.memory_space<vmem>>, vector<64x32xf32>
    %c160 = arith.constant 160 : index
    %c0_6 = arith.constant 0 : index
    %5 = vector.load %arg2[%c160, %c0_6] : memref<344x96xf32, #tpu.memory_space<vmem>>, vector<8x96xf32>
    %6 = vector.extract_strided_slice %5 {offsets = [0, 0], sizes = [1, 96], strides = [1, 1]} : vector<8x96xf32> to vector<1x96xf32>
    %7 = vector.extract_strided_slice %5 {offsets = [1, 0], sizes = [1, 32], strides = [1, 1]} : vector<8x96xf32> to vector<1x32xf32>
    %8 = vector.extract_strided_slice %5 {offsets = [1, 32], sizes = [1, 32], strides = [1, 1]} : vector<8x96xf32> to vector<1x32xf32>
    %9 = vector.extract_strided_slice %5 {offsets = [1, 64], sizes = [1, 32], strides = [1, 1]} : vector<8x96xf32> to vector<1x32xf32>
    %10 = vector.extract_strided_slice %5 {offsets = [2, 0], sizes = [1, 32], strides = [1, 1]} : vector<8x96xf32> to vector<1x32xf32>
    %11 = vector.extract_strided_slice %5 {offsets = [2, 32], sizes = [1, 32], strides = [1, 1]} : vector<8x96xf32> to vector<1x32xf32>
    %12 = vector.extract_strided_slice %5 {offsets = [2, 64], sizes = [1, 32], strides = [1, 1]} : vector<8x96xf32> to vector<1x32xf32>
    %13 = vector.extract_strided_slice %5 {offsets = [3, 0], sizes = [1, 64], strides = [1, 1]} : vector<8x96xf32> to vector<1x64xf32>
    %cst = arith.constant dense<0.000000e+00> : vector<16xf32>
    %14 = vector.multi_reduction <add>, %0, %cst [1] : vector<16x32xf32> to vector<16xf32>
    %15 = vector.shape_cast %14 : vector<16xf32> to vector<16x1xf32>
    %cst_7 = arith.constant 3.200000e+01 : f32
    %16 = vector.broadcast %cst_7 : f32 to vector<16x1xf32>
    %17 = arith.divf %15, %16 : vector<16x1xf32>
    %18 = vector.broadcast %17 : vector<16x1xf32> to vector<16x32xf32>
    %19 = arith.subf %0, %18 : vector<16x32xf32>
    %20 = arith.mulf %19, %19 : vector<16x32xf32>
    %cst_8 = arith.constant dense<0.000000e+00> : vector<16xf32>
    %21 = vector.multi_reduction <add>, %20, %cst_8 [1] : vector<16x32xf32> to vector<16xf32>
    %22 = vector.shape_cast %21 : vector<16xf32> to vector<16x1xf32>
    %cst_9 = arith.constant 3.200000e+01 : f32
    %23 = vector.broadcast %cst_9 : f32 to vector<16x1xf32>
    %24 = arith.divf %22, %23 : vector<16x1xf32>
    %25 = vector.broadcast %17 : vector<16x1xf32> to vector<16x32xf32>
    %26 = arith.subf %0, %25 : vector<16x32xf32>
    %cst_10 = arith.constant 9.99999997E-7 : f32
    %27 = vector.broadcast %cst_10 : f32 to vector<16x1xf32>
    %28 = arith.addf %24, %27 : vector<16x1xf32>
    %29 = math.rsqrt %28 : vector<16x1xf32>
    %30 = vector.broadcast %29 : vector<16x1xf32> to vector<16x32xf32>
    %31 = arith.mulf %26, %30 : vector<16x32xf32>
    %32 = vector.broadcast %7 : vector<1x32xf32> to vector<16x32xf32>
    %33 = arith.mulf %31, %32 : vector<16x32xf32>
    %34 = vector.broadcast %8 : vector<1x32xf32> to vector<16x32xf32>
    %35 = arith.addf %33, %34 : vector<16x32xf32>
    %cst_11 = arith.constant dense<0.000000e+00> : vector<16x96xf32>
    %36 = tpu.matmul %35, %1, %cst_11 {dimension_numbers = #tpu.dot_dimension_numbers<[1], [0], [0], [1], [0, 0, 1, 1], [], []>} : vector<16x32xf32>, vector<32x96xf32>, vector<16x96xf32> -> vector<16x96xf32>
    %37 = vector.broadcast %6 : vector<1x96xf32> to vector<16x96xf32>
    %38 = arith.addf %36, %37 : vector<16x96xf32>
    %39 = vector.extract_strided_slice %38 {offsets = [0, 0], sizes = [16, 24], strides = [1, 1]} : vector<16x96xf32> to vector<16x24xf32>
    %40 = vector.shape_cast %39 : vector<16x24xf32> to vector<2x8x24xf32>
    %41 = vector.extract_strided_slice %38 {offsets = [0, 24], sizes = [16, 24], strides = [1, 1]} : vector<16x96xf32> to vector<16x24xf32>
    %42 = vector.shape_cast %41 : vector<16x24xf32> to vector<2x8x24xf32>
    %43 = vector.extract_strided_slice %38 {offsets = [0, 48], sizes = [16, 24], strides = [1, 1]} : vector<16x96xf32> to vector<16x24xf32>
    %44 = vector.shape_cast %43 : vector<16x24xf32> to vector<2x8x24xf32>
    %45 = vector.extract_strided_slice %38 {offsets = [0, 72], sizes = [16, 24], strides = [1, 1]} : vector<16x96xf32> to vector<16x24xf32>
    %46 = vector.shape_cast %45 : vector<16x24xf32> to vector<2x8x24xf32>
    %47 = tpu.concatenate %40, %42, %44, %46 in 0 : vector<2x8x24xf32>, vector<2x8x24xf32>, vector<2x8x24xf32>, vector<2x8x24xf32> -> vector<8x8x24xf32>
    %48 = vector.extract_strided_slice %47 {offsets = [0, 0, 0], sizes = [8, 8, 8], strides = [1, 1, 1]} : vector<8x8x24xf32> to vector<8x8x8xf32>
    %49 = vector.extract_strided_slice %47 {offsets = [0, 0, 8], sizes = [8, 8, 8], strides = [1, 1, 1]} : vector<8x8x24xf32> to vector<8x8x8xf32>
    %50 = vector.extract_strided_slice %47 {offsets = [0, 0, 16], sizes = [8, 8, 8], strides = [1, 1, 1]} : vector<8x8x24xf32> to vector<8x8x8xf32>
    "tpu.trace_start"() <{level = 10 : i32, message = "bqd,bkd->bqk"}> : () -> ()
    %cst_12 = arith.constant dense<0.000000e+00> : vector<8x8x8xf32>
    %51 = tpu.matmul %48, %49, %cst_12 {dimension_numbers = #tpu.dot_dimension_numbers<[2], [2], [1], [1], [0, 0, 0, 1, 1, 1], [0], [0]>} : vector<8x8x8xf32>, vector<8x8x8xf32>, vector<8x8x8xf32> -> vector<8x8x8xf32>
    "tpu.trace_stop"() : () -> ()
    %cst_13 = arith.constant 0.353553385 : f32
    %52 = vector.broadcast %cst_13 : f32 to vector<8x8x8xf32>
    %53 = arith.mulf %51, %52 : vector<8x8x8xf32>
    %cst_14 = arith.constant dense<0xFF800000> : vector<8x8xf32>
    %54 = vector.multi_reduction <maximumf>, %53, %cst_14 [2] : vector<8x8x8xf32> to vector<8x8xf32>
    %55 = vector.shape_cast %54 : vector<8x8xf32> to vector<8x8x1xf32>
    %56 = vector.broadcast %55 : vector<8x8x1xf32> to vector<8x8x8xf32>
    %57 = arith.subf %53, %56 : vector<8x8x8xf32>
    %58 = math.exp %57 : vector<8x8x8xf32>
    %cst_15 = arith.constant dense<0.000000e+00> : vector<8x8xf32>
    %59 = vector.multi_reduction <add>, %58, %cst_15 [2] : vector<8x8x8xf32> to vector<8x8xf32>
    %60 = vector.shape_cast %59 : vector<8x8xf32> to vector<8x8x1xf32>
    %61 = vector.broadcast %60 : vector<8x8x1xf32> to vector<8x8x8xf32>
    %62 = arith.divf %58, %61 : vector<8x8x8xf32>
    "tpu.trace_start"() <{level = 10 : i32, message = "bqk,bkd->bqd"}> : () -> ()
    %cst_16 = arith.constant dense<0.000000e+00> : vector<8x8x8xf32>
    %63 = tpu.matmul %62, %50, %cst_16 {dimension_numbers = #tpu.dot_dimension_numbers<[2], [1], [1], [2], [0, 0, 0, 1, 1, 2], [0], [0]>} : vector<8x8x8xf32>, vector<8x8x8xf32>, vector<8x8x8xf32> -> vector<8x8x8xf32>
    "tpu.trace_stop"() : () -> ()
    %64 = vector.extract_strided_slice %63 {offsets = [0, 0, 0], sizes = [2, 8, 8], strides = [1, 1, 1]} : vector<8x8x8xf32> to vector<2x8x8xf32>
    %65 = vector.shape_cast %64 : vector<2x8x8xf32> to vector<16x8xf32>
    %66 = vector.extract_strided_slice %63 {offsets = [2, 0, 0], sizes = [2, 8, 8], strides = [1, 1, 1]} : vector<8x8x8xf32> to vector<2x8x8xf32>
    %67 = vector.shape_cast %66 : vector<2x8x8xf32> to vector<16x8xf32>
    %68 = vector.extract_strided_slice %63 {offsets = [4, 0, 0], sizes = [2, 8, 8], strides = [1, 1, 1]} : vector<8x8x8xf32> to vector<2x8x8xf32>
    %69 = vector.shape_cast %68 : vector<2x8x8xf32> to vector<16x8xf32>
    %70 = vector.extract_strided_slice %63 {offsets = [6, 0, 0], sizes = [2, 8, 8], strides = [1, 1, 1]} : vector<8x8x8xf32> to vector<2x8x8xf32>
    %71 = vector.shape_cast %70 : vector<2x8x8xf32> to vector<16x8xf32>
    %72 = tpu.concatenate %65, %67, %69, %71 in 1 : vector<16x8xf32>, vector<16x8xf32>, vector<16x8xf32>, vector<16x8xf32> -> vector<16x32xf32>
    %cst_17 = arith.constant dense<0.000000e+00> : vector<16x32xf32>
    %73 = tpu.matmul %72, %2, %cst_17 {dimension_numbers = #tpu.dot_dimension_numbers<[1], [0], [0], [1], [0, 0, 1, 1], [], []>} : vector<16x32xf32>, vector<32x32xf32>, vector<16x32xf32> -> vector<16x32xf32>
    %74 = vector.broadcast %9 : vector<1x32xf32> to vector<16x32xf32>
    %75 = arith.addf %73, %74 : vector<16x32xf32>
    %76 = arith.addf %75, %0 : vector<16x32xf32>
    %cst_18 = arith.constant dense<0.000000e+00> : vector<16xf32>
    %77 = vector.multi_reduction <add>, %76, %cst_18 [1] : vector<16x32xf32> to vector<16xf32>
    %78 = vector.shape_cast %77 : vector<16xf32> to vector<16x1xf32>
    %cst_19 = arith.constant 3.200000e+01 : f32
    %79 = vector.broadcast %cst_19 : f32 to vector<16x1xf32>
    %80 = arith.divf %78, %79 : vector<16x1xf32>
    %81 = vector.broadcast %80 : vector<16x1xf32> to vector<16x32xf32>
    %82 = arith.subf %76, %81 : vector<16x32xf32>
    %83 = arith.mulf %82, %82 : vector<16x32xf32>
    %cst_20 = arith.constant dense<0.000000e+00> : vector<16xf32>
    %84 = vector.multi_reduction <add>, %83, %cst_20 [1] : vector<16x32xf32> to vector<16xf32>
    %85 = vector.shape_cast %84 : vector<16xf32> to vector<16x1xf32>
    %cst_21 = arith.constant 3.200000e+01 : f32
    %86 = vector.broadcast %cst_21 : f32 to vector<16x1xf32>
    %87 = arith.divf %85, %86 : vector<16x1xf32>
    %88 = vector.broadcast %80 : vector<16x1xf32> to vector<16x32xf32>
    %89 = arith.subf %76, %88 : vector<16x32xf32>
    %cst_22 = arith.constant 9.99999997E-7 : f32
    %90 = vector.broadcast %cst_22 : f32 to vector<16x1xf32>
    %91 = arith.addf %87, %90 : vector<16x1xf32>
    %92 = math.rsqrt %91 : vector<16x1xf32>
    %93 = vector.broadcast %92 : vector<16x1xf32> to vector<16x32xf32>
    %94 = arith.mulf %89, %93 : vector<16x32xf32>
    %95 = vector.broadcast %10 : vector<1x32xf32> to vector<16x32xf32>
    %96 = arith.mulf %94, %95 : vector<16x32xf32>
    %97 = vector.broadcast %11 : vector<1x32xf32> to vector<16x32xf32>
    %98 = arith.addf %96, %97 : vector<16x32xf32>
    %cst_23 = arith.constant dense<0.000000e+00> : vector<16x64xf32>
    %99 = tpu.matmul %98, %3, %cst_23 {dimension_numbers = #tpu.dot_dimension_numbers<[1], [0], [0], [1], [0, 0, 1, 1], [], []>} : vector<16x32xf32>, vector<32x64xf32>, vector<16x64xf32> -> vector<16x64xf32>
    %100 = vector.broadcast %13 : vector<1x64xf32> to vector<16x64xf32>
    %101 = arith.addf %99, %100 : vector<16x64xf32>
    %cst_24 = arith.constant 5.000000e-01 : f32
    %102 = vector.broadcast %cst_24 : f32 to vector<16x64xf32>
    %103 = arith.mulf %102, %101 : vector<16x64xf32>
    %cst_25 = arith.constant 4.471500e-02 : f32
    %104 = vector.broadcast %cst_25 : f32 to vector<16x64xf32>
    %105 = arith.mulf %104, %101 : vector<16x64xf32>
    %106 = arith.mulf %105, %101 : vector<16x64xf32>
    %107 = arith.mulf %106, %101 : vector<16x64xf32>
    %108 = arith.addf %101, %107 : vector<16x64xf32>
    %cst_26 = arith.constant 0.797884583 : f32
    %109 = vector.broadcast %cst_26 : f32 to vector<16x64xf32>
    %110 = arith.mulf %109, %108 : vector<16x64xf32>
    %111 = math.tanh %110 : vector<16x64xf32>
    %cst_27 = arith.constant 1.000000e+00 : f32
    %112 = vector.broadcast %cst_27 : f32 to vector<16x64xf32>
    %113 = arith.addf %112, %111 : vector<16x64xf32>
    %114 = arith.mulf %103, %113 : vector<16x64xf32>
    %cst_28 = arith.constant dense<0.000000e+00> : vector<16x32xf32>
    %115 = tpu.matmul %114, %4, %cst_28 {dimension_numbers = #tpu.dot_dimension_numbers<[1], [0], [0], [1], [0, 0, 1, 1], [], []>} : vector<16x64xf32>, vector<64x32xf32>, vector<16x32xf32> -> vector<16x32xf32>
    %116 = vector.broadcast %12 : vector<1x32xf32> to vector<16x32xf32>
    %117 = arith.addf %115, %116 : vector<16x32xf32>
    %118 = arith.addf %117, %76 : vector<16x32xf32>
    %c168 = arith.constant 168 : index
    %c0_29 = arith.constant 0 : index
    %119 = vector.load %arg2[%c168, %c0_29] : memref<344x96xf32, #tpu.memory_space<vmem>>, vector<32x96xf32>
    %c200 = arith.constant 200 : index
    %c0_30 = arith.constant 0 : index
    %120 = vector.load %arg2[%c200, %c0_30] : memref<344x96xf32, #tpu.memory_space<vmem>>, vector<32x32xf32>
    %c232 = arith.constant 232 : index
    %c0_31 = arith.constant 0 : index
    %121 = vector.load %arg2[%c232, %c0_31] : memref<344x96xf32, #tpu.memory_space<vmem>>, vector<32x64xf32>
    %c264 = arith.constant 264 : index
    %c0_32 = arith.constant 0 : index
    %122 = vector.load %arg2[%c264, %c0_32] : memref<344x96xf32, #tpu.memory_space<vmem>>, vector<64x32xf32>
    %c328 = arith.constant 328 : index
    %c0_33 = arith.constant 0 : index
    %123 = vector.load %arg2[%c328, %c0_33] : memref<344x96xf32, #tpu.memory_space<vmem>>, vector<8x96xf32>
    %124 = vector.extract_strided_slice %123 {offsets = [0, 0], sizes = [1, 96], strides = [1, 1]} : vector<8x96xf32> to vector<1x96xf32>
    %125 = vector.extract_strided_slice %123 {offsets = [1, 0], sizes = [1, 32], strides = [1, 1]} : vector<8x96xf32> to vector<1x32xf32>
    %126 = vector.extract_strided_slice %123 {offsets = [1, 32], sizes = [1, 32], strides = [1, 1]} : vector<8x96xf32> to vector<1x32xf32>
    %127 = vector.extract_strided_slice %123 {offsets = [1, 64], sizes = [1, 32], strides = [1, 1]} : vector<8x96xf32> to vector<1x32xf32>
    %128 = vector.extract_strided_slice %123 {offsets = [2, 0], sizes = [1, 32], strides = [1, 1]} : vector<8x96xf32> to vector<1x32xf32>
    %129 = vector.extract_strided_slice %123 {offsets = [2, 32], sizes = [1, 32], strides = [1, 1]} : vector<8x96xf32> to vector<1x32xf32>
    %130 = vector.extract_strided_slice %123 {offsets = [2, 64], sizes = [1, 32], strides = [1, 1]} : vector<8x96xf32> to vector<1x32xf32>
    %131 = vector.extract_strided_slice %123 {offsets = [3, 0], sizes = [1, 64], strides = [1, 1]} : vector<8x96xf32> to vector<1x64xf32>
    %cst_34 = arith.constant dense<0.000000e+00> : vector<16xf32>
    %132 = vector.multi_reduction <add>, %118, %cst_34 [1] : vector<16x32xf32> to vector<16xf32>
    %133 = vector.shape_cast %132 : vector<16xf32> to vector<16x1xf32>
    %cst_35 = arith.constant 3.200000e+01 : f32
    %134 = vector.broadcast %cst_35 : f32 to vector<16x1xf32>
    %135 = arith.divf %133, %134 : vector<16x1xf32>
    %136 = vector.broadcast %135 : vector<16x1xf32> to vector<16x32xf32>
    %137 = arith.subf %118, %136 : vector<16x32xf32>
    %138 = arith.mulf %137, %137 : vector<16x32xf32>
    %cst_36 = arith.constant dense<0.000000e+00> : vector<16xf32>
    %139 = vector.multi_reduction <add>, %138, %cst_36 [1] : vector<16x32xf32> to vector<16xf32>
    %140 = vector.shape_cast %139 : vector<16xf32> to vector<16x1xf32>
    %cst_37 = arith.constant 3.200000e+01 : f32
    %141 = vector.broadcast %cst_37 : f32 to vector<16x1xf32>
    %142 = arith.divf %140, %141 : vector<16x1xf32>
    %143 = vector.broadcast %135 : vector<16x1xf32> to vector<16x32xf32>
    %144 = arith.subf %118, %143 : vector<16x32xf32>
    %cst_38 = arith.constant 9.99999997E-7 : f32
    %145 = vector.broadcast %cst_38 : f32 to vector<16x1xf32>
    %146 = arith.addf %142, %145 : vector<16x1xf32>
    %147 = math.rsqrt %146 : vector<16x1xf32>
    %148 = vector.broadcast %147 : vector<16x1xf32> to vector<16x32xf32>
    %149 = arith.mulf %144, %148 : vector<16x32xf32>
    %150 = vector.broadcast %125 : vector<1x32xf32> to vector<16x32xf32>
    %151 = arith.mulf %149, %150 : vector<16x32xf32>
    %152 = vector.broadcast %126 : vector<1x32xf32> to vector<16x32xf32>
    %153 = arith.addf %151, %152 : vector<16x32xf32>
    %cst_39 = arith.constant dense<0.000000e+00> : vector<16x96xf32>
    %154 = tpu.matmul %153, %119, %cst_39 {dimension_numbers = #tpu.dot_dimension_numbers<[1], [0], [0], [1], [0, 0, 1, 1], [], []>} : vector<16x32xf32>, vector<32x96xf32>, vector<16x96xf32> -> vector<16x96xf32>
    %155 = vector.broadcast %124 : vector<1x96xf32> to vector<16x96xf32>
    %156 = arith.addf %154, %155 : vector<16x96xf32>
    %157 = vector.extract_strided_slice %156 {offsets = [0, 0], sizes = [16, 24], strides = [1, 1]} : vector<16x96xf32> to vector<16x24xf32>
    %158 = vector.shape_cast %157 : vector<16x24xf32> to vector<2x8x24xf32>
    %159 = vector.extract_strided_slice %156 {offsets = [0, 24], sizes = [16, 24], strides = [1, 1]} : vector<16x96xf32> to vector<16x24xf32>
    %160 = vector.shape_cast %159 : vector<16x24xf32> to vector<2x8x24xf32>
    %161 = vector.extract_strided_slice %156 {offsets = [0, 48], sizes = [16, 24], strides = [1, 1]} : vector<16x96xf32> to vector<16x24xf32>
    %162 = vector.shape_cast %161 : vector<16x24xf32> to vector<2x8x24xf32>
    %163 = vector.extract_strided_slice %156 {offsets = [0, 72], sizes = [16, 24], strides = [1, 1]} : vector<16x96xf32> to vector<16x24xf32>
    %164 = vector.shape_cast %163 : vector<16x24xf32> to vector<2x8x24xf32>
    %165 = tpu.concatenate %158, %160, %162, %164 in 0 : vector<2x8x24xf32>, vector<2x8x24xf32>, vector<2x8x24xf32>, vector<2x8x24xf32> -> vector<8x8x24xf32>
    %166 = vector.extract_strided_slice %165 {offsets = [0, 0, 0], sizes = [8, 8, 8], strides = [1, 1, 1]} : vector<8x8x24xf32> to vector<8x8x8xf32>
    %167 = vector.extract_strided_slice %165 {offsets = [0, 0, 8], sizes = [8, 8, 8], strides = [1, 1, 1]} : vector<8x8x24xf32> to vector<8x8x8xf32>
    %168 = vector.extract_strided_slice %165 {offsets = [0, 0, 16], sizes = [8, 8, 8], strides = [1, 1, 1]} : vector<8x8x24xf32> to vector<8x8x8xf32>
    "tpu.trace_start"() <{level = 10 : i32, message = "bqd,bkd->bqk"}> : () -> ()
    %cst_40 = arith.constant dense<0.000000e+00> : vector<8x8x8xf32>
    %169 = tpu.matmul %166, %167, %cst_40 {dimension_numbers = #tpu.dot_dimension_numbers<[2], [2], [1], [1], [0, 0, 0, 1, 1, 1], [0], [0]>} : vector<8x8x8xf32>, vector<8x8x8xf32>, vector<8x8x8xf32> -> vector<8x8x8xf32>
    "tpu.trace_stop"() : () -> ()
    %cst_41 = arith.constant 0.353553385 : f32
    %170 = vector.broadcast %cst_41 : f32 to vector<8x8x8xf32>
    %171 = arith.mulf %169, %170 : vector<8x8x8xf32>
    %cst_42 = arith.constant dense<0xFF800000> : vector<8x8xf32>
    %172 = vector.multi_reduction <maximumf>, %171, %cst_42 [2] : vector<8x8x8xf32> to vector<8x8xf32>
    %173 = vector.shape_cast %172 : vector<8x8xf32> to vector<8x8x1xf32>
    %174 = vector.broadcast %173 : vector<8x8x1xf32> to vector<8x8x8xf32>
    %175 = arith.subf %171, %174 : vector<8x8x8xf32>
    %176 = math.exp %175 : vector<8x8x8xf32>
    %cst_43 = arith.constant dense<0.000000e+00> : vector<8x8xf32>
    %177 = vector.multi_reduction <add>, %176, %cst_43 [2] : vector<8x8x8xf32> to vector<8x8xf32>
    %178 = vector.shape_cast %177 : vector<8x8xf32> to vector<8x8x1xf32>
    %179 = vector.broadcast %178 : vector<8x8x1xf32> to vector<8x8x8xf32>
    %180 = arith.divf %176, %179 : vector<8x8x8xf32>
    "tpu.trace_start"() <{level = 10 : i32, message = "bqk,bkd->bqd"}> : () -> ()
    %cst_44 = arith.constant dense<0.000000e+00> : vector<8x8x8xf32>
    %181 = tpu.matmul %180, %168, %cst_44 {dimension_numbers = #tpu.dot_dimension_numbers<[2], [1], [1], [2], [0, 0, 0, 1, 1, 2], [0], [0]>} : vector<8x8x8xf32>, vector<8x8x8xf32>, vector<8x8x8xf32> -> vector<8x8x8xf32>
    "tpu.trace_stop"() : () -> ()
    %182 = vector.extract_strided_slice %181 {offsets = [0, 0, 0], sizes = [2, 8, 8], strides = [1, 1, 1]} : vector<8x8x8xf32> to vector<2x8x8xf32>
    %183 = vector.shape_cast %182 : vector<2x8x8xf32> to vector<16x8xf32>
    %184 = vector.extract_strided_slice %181 {offsets = [2, 0, 0], sizes = [2, 8, 8], strides = [1, 1, 1]} : vector<8x8x8xf32> to vector<2x8x8xf32>
    %185 = vector.shape_cast %184 : vector<2x8x8xf32> to vector<16x8xf32>
    %186 = vector.extract_strided_slice %181 {offsets = [4, 0, 0], sizes = [2, 8, 8], strides = [1, 1, 1]} : vector<8x8x8xf32> to vector<2x8x8xf32>
    %187 = vector.shape_cast %186 : vector<2x8x8xf32> to vector<16x8xf32>
    %188 = vector.extract_strided_slice %181 {offsets = [6, 0, 0], sizes = [2, 8, 8], strides = [1, 1, 1]} : vector<8x8x8xf32> to vector<2x8x8xf32>
    %189 = vector.shape_cast %188 : vector<2x8x8xf32> to vector<16x8xf32>
    %190 = tpu.concatenate %183, %185, %187, %189 in 1 : vector<16x8xf32>, vector<16x8xf32>, vector<16x8xf32>, vector<16x8xf32> -> vector<16x32xf32>
    %cst_45 = arith.constant dense<0.000000e+00> : vector<16x32xf32>
    %191 = tpu.matmul %190, %120, %cst_45 {dimension_numbers = #tpu.dot_dimension_numbers<[1], [0], [0], [1], [0, 0, 1, 1], [], []>} : vector<16x32xf32>, vector<32x32xf32>, vector<16x32xf32> -> vector<16x32xf32>
    %192 = vector.broadcast %127 : vector<1x32xf32> to vector<16x32xf32>
    %193 = arith.addf %191, %192 : vector<16x32xf32>
    %194 = arith.addf %193, %118 : vector<16x32xf32>
    %cst_46 = arith.constant dense<0.000000e+00> : vector<16xf32>
    %195 = vector.multi_reduction <add>, %194, %cst_46 [1] : vector<16x32xf32> to vector<16xf32>
    %196 = vector.shape_cast %195 : vector<16xf32> to vector<16x1xf32>
    %cst_47 = arith.constant 3.200000e+01 : f32
    %197 = vector.broadcast %cst_47 : f32 to vector<16x1xf32>
    %198 = arith.divf %196, %197 : vector<16x1xf32>
    %199 = vector.broadcast %198 : vector<16x1xf32> to vector<16x32xf32>
    %200 = arith.subf %194, %199 : vector<16x32xf32>
    %201 = arith.mulf %200, %200 : vector<16x32xf32>
    %cst_48 = arith.constant dense<0.000000e+00> : vector<16xf32>
    %202 = vector.multi_reduction <add>, %201, %cst_48 [1] : vector<16x32xf32> to vector<16xf32>
    %203 = vector.shape_cast %202 : vector<16xf32> to vector<16x1xf32>
    %cst_49 = arith.constant 3.200000e+01 : f32
    %204 = vector.broadcast %cst_49 : f32 to vector<16x1xf32>
    %205 = arith.divf %203, %204 : vector<16x1xf32>
    %206 = vector.broadcast %198 : vector<16x1xf32> to vector<16x32xf32>
    %207 = arith.subf %194, %206 : vector<16x32xf32>
    %cst_50 = arith.constant 9.99999997E-7 : f32
    %208 = vector.broadcast %cst_50 : f32 to vector<16x1xf32>
    %209 = arith.addf %205, %208 : vector<16x1xf32>
    %210 = math.rsqrt %209 : vector<16x1xf32>
    %211 = vector.broadcast %210 : vector<16x1xf32> to vector<16x32xf32>
    %212 = arith.mulf %207, %211 : vector<16x32xf32>
    %213 = vector.broadcast %128 : vector<1x32xf32> to vector<16x32xf32>
    %214 = arith.mulf %212, %213 : vector<16x32xf32>
    %215 = vector.broadcast %129 : vector<1x32xf32> to vector<16x32xf32>
    %216 = arith.addf %214, %215 : vector<16x32xf32>
    %cst_51 = arith.constant dense<0.000000e+00> : vector<16x64xf32>
    %217 = tpu.matmul %216, %121, %cst_51 {dimension_numbers = #tpu.dot_dimension_numbers<[1], [0], [0], [1], [0, 0, 1, 1], [], []>} : vector<16x32xf32>, vector<32x64xf32>, vector<16x64xf32> -> vector<16x64xf32>
    %218 = vector.broadcast %131 : vector<1x64xf32> to vector<16x64xf32>
    %219 = arith.addf %217, %218 : vector<16x64xf32>
    %cst_52 = arith.constant 5.000000e-01 : f32
    %220 = vector.broadcast %cst_52 : f32 to vector<16x64xf32>
    %221 = arith.mulf %220, %219 : vector<16x64xf32>
    %cst_53 = arith.constant 4.471500e-02 : f32
    %222 = vector.broadcast %cst_53 : f32 to vector<16x64xf32>
    %223 = arith.mulf %222, %219 : vector<16x64xf32>
    %224 = arith.mulf %223, %219 : vector<16x64xf32>
    %225 = arith.mulf %224, %219 : vector<16x64xf32>
    %226 = arith.addf %219, %225 : vector<16x64xf32>
    %cst_54 = arith.constant 0.797884583 : f32
    %227 = vector.broadcast %cst_54 : f32 to vector<16x64xf32>
    %228 = arith.mulf %227, %226 : vector<16x64xf32>
    %229 = math.tanh %228 : vector<16x64xf32>
    %cst_55 = arith.constant 1.000000e+00 : f32
    %230 = vector.broadcast %cst_55 : f32 to vector<16x64xf32>
    %231 = arith.addf %230, %229 : vector<16x64xf32>
    %232 = arith.mulf %221, %231 : vector<16x64xf32>
    %cst_56 = arith.constant dense<0.000000e+00> : vector<16x32xf32>
    %233 = tpu.matmul %232, %122, %cst_56 {dimension_numbers = #tpu.dot_dimension_numbers<[1], [0], [0], [1], [0, 0, 1, 1], [], []>} : vector<16x64xf32>, vector<64x32xf32>, vector<16x32xf32> -> vector<16x32xf32>
    %234 = vector.broadcast %130 : vector<1x32xf32> to vector<16x32xf32>
    %235 = arith.addf %233, %234 : vector<16x32xf32>
    %236 = arith.addf %235, %194 : vector<16x32xf32>
    %c336 = arith.constant 336 : index
    %c0_57 = arith.constant 0 : index
    %237 = vector.load %arg2[%c336, %c0_57] : memref<344x96xf32, #tpu.memory_space<vmem>>, vector<1x96xf32>
    %238 = vector.extract_strided_slice %237 {offsets = [0, 0], sizes = [1, 32], strides = [1, 1]} : vector<1x96xf32> to vector<1x32xf32>
    %239 = vector.extract_strided_slice %237 {offsets = [0, 32], sizes = [1, 32], strides = [1, 1]} : vector<1x96xf32> to vector<1x32xf32>
    %cst_58 = arith.constant dense<0.000000e+00> : vector<16xf32>
    %240 = vector.multi_reduction <add>, %236, %cst_58 [1] : vector<16x32xf32> to vector<16xf32>
    %241 = vector.shape_cast %240 : vector<16xf32> to vector<16x1xf32>
    %cst_59 = arith.constant 3.200000e+01 : f32
    %242 = vector.broadcast %cst_59 : f32 to vector<16x1xf32>
    %243 = arith.divf %241, %242 : vector<16x1xf32>
    %244 = vector.broadcast %243 : vector<16x1xf32> to vector<16x32xf32>
    %245 = arith.subf %236, %244 : vector<16x32xf32>
    %246 = arith.mulf %245, %245 : vector<16x32xf32>
    %cst_60 = arith.constant dense<0.000000e+00> : vector<16xf32>
    %247 = vector.multi_reduction <add>, %246, %cst_60 [1] : vector<16x32xf32> to vector<16xf32>
    %248 = vector.shape_cast %247 : vector<16xf32> to vector<16x1xf32>
    %cst_61 = arith.constant 3.200000e+01 : f32
    %249 = vector.broadcast %cst_61 : f32 to vector<16x1xf32>
    %250 = arith.divf %248, %249 : vector<16x1xf32>
    %251 = vector.broadcast %243 : vector<16x1xf32> to vector<16x32xf32>
    %252 = arith.subf %236, %251 : vector<16x32xf32>
    %cst_62 = arith.constant 9.99999997E-7 : f32
    %253 = vector.broadcast %cst_62 : f32 to vector<16x1xf32>
    %254 = arith.addf %250, %253 : vector<16x1xf32>
    %255 = math.rsqrt %254 : vector<16x1xf32>
    %256 = vector.broadcast %255 : vector<16x1xf32> to vector<16x32xf32>
    %257 = arith.mulf %252, %256 : vector<16x32xf32>
    %258 = vector.broadcast %238 : vector<1x32xf32> to vector<16x32xf32>
    %259 = arith.mulf %257, %258 : vector<16x32xf32>
    %260 = vector.broadcast %239 : vector<1x32xf32> to vector<16x32xf32>
    %261 = arith.addf %259, %260 : vector<16x32xf32>
    %c0_63 = arith.constant 0 : index
    %c0_64 = arith.constant 0 : index
    %262 = vector.load %arg3[%c0_63, %c0_64] : memref<16x32xf32, #tpu.memory_space<vmem>>, vector<16x32xf32>
    tpu.vector_store %arg3[%c0_63, %c0_64], %261 {strides = array<i32>} : memref<16x32xf32, #tpu.memory_space<vmem>>, vector<16x32xf32>,
    return
  }
  func.func @transform_0(%arg0: i32) -> (i32, i32) {
    %c0_i32 = arith.constant 0 : i32
    %c0_i32_0 = arith.constant 0 : i32
    %c0_i32_1 = arith.constant 0 : i32
    return %c0_i32, %c0_i32_0 : i32, i32
  }
  func.func @transform_1(%arg0: i32) -> (i32, i32) {
    %c0_i32 = arith.constant 0 : i32
    %c0_i32_0 = arith.constant 0 : i32
    %c0_i32_1 = arith.constant 0 : i32
    return %c0_i32, %c0_i32_0 : i32, i32
  }
  func.func @transform_2(%arg0: i32) -> (i32, i32) {
    %c0_i32 = arith.constant 0 : i32
    %c0_i32_0 = arith.constant 0 : i32
    %c0_i32_1 = arith.constant 0 : i32
    return %c0_i32, %c0_i32_0 : i32, i32
  }
}

</mosaic_0001>

<llo_original>
// kernel: tpu_custom_call.1
$region0: #{tpu_custom_call.1}
  #allocation0 [shape = 'u32[]', space=smem, size = 0x4, offset = 0x4, fixed_abs, tag = 'smem constant byte address 0x4 - core index']
  #allocation1 [shape = 'u32[72,128]{1,0:T(1,128)}', space=vmem, size = 0x9000, scoped, tag = 'internal scratch']
  %s0 = inlined_call_operand.vmem [shape: f32[16,32], index: 0, kind: input, shape index: {}]
  %s1 = inlined_call_operand.vmem [shape: f32[344,96], index: 1, kind: input, shape index: {}]
  %s2 = inlined_call_operand.hbm [shape: f32[16,32], index: 2, kind: output, shape index: {}]
  %s3 = sld [smem:[#allocation0]]
  $region18: #{tpu_custom_call.1} parent=0
    _
  %s5 = ssub.s32 1, %s3
  %s6 = scalar_select 0, %s5, %s3
  $region1: #{tpu_custom_call.1} parent=0
    #allocation2 [shape = 'u8[8192]{0}', space=vmem, size = 0x2000, scoped, tag = 'output window, operand 0, single buffered']
    #allocation3 [shape = 's32[1]{0}', space=sflag, size = 0x4, scoped, tag = 'scoped memory for tpu_custom_call.1']
    %7 = vsyncpa [#allocation3], 0
    // Predicated region
    $region2: #{tpu_custom_call.1} parent=1 // pred_check
      _
    $region3: #{tpu_custom_call.1} parent=1 // pred_check_branch
      %9 = sbr.rel (0) target = $region5
    $region4: #{tpu_custom_call.1} parent=1 // pred_region
      _
    $region5: #{tpu_custom_call.1} parent=1 // pred_fallthru
      _
    // Predicated region
    $region6: #{tpu_custom_call.1} parent=1 // pred_check
      _
    $region7: #{tpu_custom_call.1} parent=1 // pred_check_branch
      %11 = sbr.rel (0) target = $region9
    $region8: #{tpu_custom_call.1} parent=1 // pred_region
      _
    $region9: #{tpu_custom_call.1} parent=1 // pred_fallthru
      _
    %v12 = vld [vmem:[%s0] sm:$0xff]
    %v13 = vld [vmem:[%s0 + $0x8] sm:$0xff]
    %v14 = vld [vmem:[%s1] sm:$0xff]
    %v15 = vld [vmem:[%s1 + $0x8] sm:$0xff]
    %v16 = vld [vmem:[%s1 + $0x10] sm:$0xff]
    %v17 = vld [vmem:[%s1 + $0x18] sm:$0xff]
    %v18 = vld [vmem:[%s1 + $0x20] sm:$0xff]
    %v19 = vld [vmem:[%s1 + $0x28] sm:$0xff]
    %v20 = vld [vmem:[%s1 + $0x30] sm:$0xff]
    %v21 = vld [vmem:[%s1 + $0x38] sm:$0xff]
    %v22 = vld [vmem:[%s1 + $0x40] sm:$0xff]
    %v23 = vld [vmem:[%s1 + $0x48] sm:$0xff]
    %v24 = vld [vmem:[%s1 + $0x50] sm:$0xff]
    %v25 = vld [vmem:[%s1 + $0x58] sm:$0xff]
    %v26 = vld [vmem:[%s1 + $0x60] sm:$0xff]
    %v27 = vld [vmem:[%s1 + $0x68] sm:$0xff]
    %v28 = vld [vmem:[%s1 + $0x70] sm:$0xff]
    %v29 = vld [vmem:[%s1 + $0x78] sm:$0xff]
    %v30 = vld [vmem:[%s1 + $0x80] sm:$0xff]
    %v31 = vld [vmem:[%s1 + $0x88] sm:$0xff]
    %v32 = vld [vmem:[%s1 + $0x90] sm:$0xff]
    %v33 = vld [vmem:[%s1 + $0x98] sm:$0xff]
    %v34 = vld [vmem:[%s1 + $0xa0] sm:$0xff]
    %vm35 = vcmask 261120
    %v36 = vsel %vm35, %v12, 0.0
    %37 = vadd.xlane.f32.xlu0 %v36
    %v38 = vpop.xlane.xlu0 %37
    %v39 = vsel %vm35, %v13, 0.0
    %40 = vadd.xlane.f32.xlu0 %v39
    %v41 = vpop.xlane.xlu0 %40
    %v42 = vrcp.pop 32.0
    %v43 = vmul.f32 32.0, %v42
    %v44 = vsub.f32 1.0, %v43
    %v45 = vmul.f32 %v42, %v44
    %v46 = vadd.f32 %v42, %v45
    %vm47 = vweird.f32 %v42
    %v48 = vsel %vm47, %v42, %v46
    %v49 = vmul.f32 %v38, %v48
    %v50 = vmul.f32 %v41, %v48
    %v51 = vsub.f32 %v12, %v49
    %v52 = vsub.f32 %v13, %v50
    %v53 = vmul.f32 %v51, %v51
    %v54 = vmul.f32 %v52, %v52
    %v55 = vsel %vm35, %v53, 0.0
    %56 = vadd.xlane.f32.xlu0 %v55
    %v57 = vpop.xlane.xlu0 %56
    %v58 = vsel %vm35, %v54, 0.0
    %59 = vadd.xlane.f32.xlu0 %v58
    %v60 = vpop.xlane.xlu0 %59
    %v61 = vmul.f32 %v57, %v48
    %v62 = vmul.f32 %v60, %v48
    %v63 = vadd.f32 %v61, 1e-06
    %v64 = vadd.f32 %v62, 1e-06
    %v65 = vrsqrt.pop %v63
    %v66 = vmul.f32 %v65, %v63
    %v67 = vmul.f32 %v66, %v65
    %v68 = vmul.f32 0.5, %v67
    %v69 = vsub.f32 1.5, %v68
    %v70 = vmul.f32 %v65, %v69
    %vm71 = vweird.f32 %v63
    %vm72 = vweird.f32 %v65
    %vm73 = vmor %vm71, %vm72
    %v74 = vsel %vm73, %v65, %v70
    %v75 = vrsqrt.pop %v64
    %v76 = vmul.f32 %v75, %v64
    %v77 = vmul.f32 %v76, %v75
    %v78 = vmul.f32 0.5, %v77
    %v79 = vsub.f32 1.5, %v78
    %v80 = vmul.f32 %v75, %v79
    %vm81 = vweird.f32 %v64
    %vm82 = vweird.f32 %v75
    %vm83 = vmor %vm81, %vm82
    %v84 = vsel %vm83, %v75, %v80
    %v85 = vmul.f32 %v51, %v74
    %v86 = vmul.f32 %v52, %v84
    %v87 = vperm.slane %v34, 1
    %v88 = vmul.f32 %v85, %v87
    %v89 = vmul.f32 %v86, %v87
    %91 = vrot.lane.b32.xlu0 %v87, 96
    %v92 = vpop.permute.xlu0 %91
    %v94 = vadd.f32 %v88, %v92
    %v95 = vadd.f32 %v89, %v92
    %v96 = vperm.slane %v34, 0
    %v98 = vsel %vm35, %v94, 0
    %v101 = vsel %vm35, %v95, 0
    %103 = vmatpush.msra.mxu0 0.0
    %104 = vmatpush.msra.mxu0 0.0
    %105 = vmatpush.msra.mxu0 0.0
    %106 = vmatpush.msra.mxu0 0.0
    %107 = vmatpush.msra.mxu0 0.0
    %108 = vmatpush.msra.mxu0 0.0
    %109 = vmatpush.msra.mxu0 0.0
    %110 = vmatpush.msra.mxu0 0.0
    %111 = vmatpush.msra.mxu0 0.0
    %112 = vmatpush.msra.mxu0 0.0
    %113 = vmatpush.msra.mxu0 0.0
    %114 = vmatpush.msra.mxu0 0.0
    %115 = vmatpush.msra.mxu0 %v17
    %116 = vmatpush.msra.mxu0 %v16
    %117 = vmatpush.msra.mxu0 %v15
    %118 = vmatpush.msra.mxu0 %v14
    %119 = vmatmul.f32.gmra.mxu0 %v98
    %v120 = vpop.f32.mrf.mxu0
    %v121 = vadd.f32 %v96, %v120
    %122 = vmatmul.f32.gmra.mxu0 %v101
    %v123 = vpop.f32.mrf.mxu0
    %v124 = vadd.f32 %v96, %v123
    %125 = vdwg.mxu0
    %128 = vrot.lane.b32.xlu0 %v121, 104
    %v129 = vpop.permute.xlu0 %128
    %130 = vrot.lane.b32.xlu0 %v124, 104
    %v131 = vpop.permute.xlu0 %130
    %132 = vrot.lane.b32.xlu0 %v121, 80
    %v133 = vpop.permute.xlu0 %132
    %134 = vrot.lane.b32.xlu0 %v124, 80
    %v135 = vpop.permute.xlu0 %134
    %136 = vrot.lane.b32.xlu0 %v121, 56
    %v137 = vpop.permute.xlu0 %136
    %138 = vrot.lane.b32.xlu0 %v124, 56
    %v139 = vpop.permute.xlu0 %138
    %140 = vrot.lane.b32.xlu0 %v121, 120
    %v141 = vpop.permute.xlu0 %140
    %vm142 = vcmask 64512
    %v143 = vsel %vm142, %v121, 0
    %v145 = vsel %vm142, %v141, 0
    %147 = vmatpush.xpose.msra.mxu0 0.0
    %148 = vmatpush.xpose.msra.mxu0 0.0
    %149 = vmatpush.xpose.msra.mxu0 0.0
    %150 = vmatpush.xpose.msra.mxu0 0.0
    %151 = vmatpush.xpose.msra.mxu0 0.0
    %152 = vmatpush.xpose.msra.mxu0 0.0
    %153 = vmatpush.xpose.msra.mxu0 0.0
    %154 = vmatpush.xpose.msra.mxu0 0.0
    %155 = vmatpush.xpose.msra.mxu0 0.0
    %156 = vmatpush.xpose.msra.mxu0 0.0
    %157 = vmatpush.xpose.msra.mxu0 0.0
    %158 = vmatpush.xpose.msra.mxu0 0.0
    %159 = vmatpush.xpose.msra.mxu0 0.0
    %160 = vmatpush.xpose.msra.mxu0 0.0
    %161 = vmatpush.xpose.msra.mxu0 0.0
    %162 = vmatpush.xpose.msra.mxu0 %v145
    %163 = vmatmul.f32.gmra.mxu0 %v143
    %v164 = vpop.f32.mrf.mxu0
    %v165 = vadd.f32 0.0, %v164
    %166 = vdwg.mxu0
    %167 = vrot.lane.b32.xlu0 %v124, 120
    %v168 = vpop.permute.xlu0 %167
    %v169 = vsel %vm142, %v124, 0
    %v171 = vsel %vm142, %v168, 0
    %173 = vmatpush.xpose.msra.mxu0 0.0
    %174 = vmatpush.xpose.msra.mxu0 0.0
    %175 = vmatpush.xpose.msra.mxu0 0.0
    %176 = vmatpush.xpose.msra.mxu0 0.0
    %177 = vmatpush.xpose.msra.mxu0 0.0
    %178 = vmatpush.xpose.msra.mxu0 0.0
    %179 = vmatpush.xpose.msra.mxu0 0.0
    %180 = vmatpush.xpose.msra.mxu0 0.0
    %181 = vmatpush.xpose.msra.mxu0 0.0
    %182 = vmatpush.xpose.msra.mxu0 0.0
    %183 = vmatpush.xpose.msra.mxu0 0.0
    %184 = vmatpush.xpose.msra.mxu0 0.0
    %185 = vmatpush.xpose.msra.mxu0 0.0
    %186 = vmatpush.xpose.msra.mxu0 0.0
    %187 = vmatpush.xpose.msra.mxu0 0.0
    %188 = vmatpush.xpose.msra.mxu0 %v171
    %189 = vmatmul.f32.gmra.mxu0 %v169
    %v190 = vpop.f32.mrf.mxu0
    %v191 = vadd.f32 0.0, %v190
    %192 = vdwg.mxu0
    %193 = vrot.lane.b32.xlu0 %v129, 120
    %v194 = vpop.permute.xlu0 %193
    %v195 = vsel %vm142, %v129, 0
    %v197 = vsel %vm142, %v194, 0
    %199 = vmatpush.xpose.msra.mxu0 0.0
    %200 = vmatpush.xpose.msra.mxu0 0.0
    %201 = vmatpush.xpose.msra.mxu0 0.0
    %202 = vmatpush.xpose.msra.mxu0 0.0
    %203 = vmatpush.xpose.msra.mxu0 0.0
    %204 = vmatpush.xpose.msra.mxu0 0.0
    %205 = vmatpush.xpose.msra.mxu0 0.0
    %206 = vmatpush.xpose.msra.mxu0 0.0
    %207 = vmatpush.xpose.msra.mxu0 0.0
    %208 = vmatpush.xpose.msra.mxu0 0.0
    %209 = vmatpush.xpose.msra.mxu0 0.0
    %210 = vmatpush.xpose.msra.mxu0 0.0
    %211 = vmatpush.xpose.msra.mxu0 0.0
    %212 = vmatpush.xpose.msra.mxu0 0.0
    %213 = vmatpush.xpose.msra.mxu0 0.0
    %214 = vmatpush.xpose.msra.mxu0 %v197
    %215 = vmatmul.f32.gmra.mxu0 %v195
    %v216 = vpop.f32.mrf.mxu0
    %v217 = vadd.f32 0.0, %v216
    %218 = vdwg.mxu0
    %219 = vrot.lane.b32.xlu0 %v131, 120
    %v220 = vpop.permute.xlu0 %219
    %v221 = vsel %vm142, %v131, 0
    %v223 = vsel %vm142, %v220, 0
    %225 = vmatpush.xpose.msra.mxu0 0.0
    %226 = vmatpush.xpose.msra.mxu0 0.0
    %227 = vmatpush.xpose.msra.mxu0 0.0
    %228 = vmatpush.xpose.msra.mxu0 0.0
    %229 = vmatpush.xpose.msra.mxu0 0.0
    %230 = vmatpush.xpose.msra.mxu0 0.0
    %231 = vmatpush.xpose.msra.mxu0 0.0
    %232 = vmatpush.xpose.msra.mxu0 0.0
    %233 = vmatpush.xpose.msra.mxu0 0.0
    %234 = vmatpush.xpose.msra.mxu0 0.0
    %235 = vmatpush.xpose.msra.mxu0 0.0
    %236 = vmatpush.xpose.msra.mxu0 0.0
    %237 = vmatpush.xpose.msra.mxu0 0.0
    %238 = vmatpush.xpose.msra.mxu0 0.0
    %239 = vmatpush.xpose.msra.mxu0 0.0
    %240 = vmatpush.xpose.msra.mxu0 %v223
    %241 = vmatmul.f32.gmra.mxu0 %v221
    %v242 = vpop.f32.mrf.mxu0
    %v243 = vadd.f32 0.0, %v242
    %244 = vdwg.mxu0
    %245 = vrot.lane.b32.xlu0 %v133, 120
    %v246 = vpop.permute.xlu0 %245
    %v247 = vsel %vm142, %v133, 0
    %v249 = vsel %vm142, %v246, 0
    %251 = vmatpush.xpose.msra.mxu0 0.0
    %252 = vmatpush.xpose.msra.mxu0 0.0
    %253 = vmatpush.xpose.msra.mxu0 0.0
    %254 = vmatpush.xpose.msra.mxu0 0.0
    %255 = vmatpush.xpose.msra.mxu0 0.0
    %256 = vmatpush.xpose.msra.mxu0 0.0
    %257 = vmatpush.xpose.msra.mxu0 0.0
    %258 = vmatpush.xpose.msra.mxu0 0.0
    %259 = vmatpush.xpose.msra.mxu0 0.0
    %260 = vmatpush.xpose.msra.mxu0 0.0
    %261 = vmatpush.xpose.msra.mxu0 0.0
    %262 = vmatpush.xpose.msra.mxu0 0.0
    %263 = vmatpush.xpose.msra.mxu0 0.0
    %264 = vmatpush.xpose.msra.mxu0 0.0
    %265 = vmatpush.xpose.msra.mxu0 0.0
    %266 = vmatpush.xpose.msra.mxu0 %v249
    %267 = vmatmul.f32.gmra.mxu0 %v247
    %v268 = vpop.f32.mrf.mxu0
    %v269 = vadd.f32 0.0, %v268
    %270 = vdwg.mxu0
    %271 = vrot.lane.b32.xlu0 %v135, 120
    %v272 = vpop.permute.xlu0 %271
    %v273 = vsel %vm142, %v135, 0
    %v275 = vsel %vm142, %v272, 0
    %277 = vmatpush.xpose.msra.mxu0 0.0
    %278 = vmatpush.xpose.msra.mxu0 0.0
    %279 = vmatpush.xpose.msra.mxu0 0.0
    %280 = vmatpush.xpose.msra.mxu0 0.0
    %281 = vmatpush.xpose.msra.mxu0 0.0
    %282 = vmatpush.xpose.msra.mxu0 0.0
    %283 = vmatpush.xpose.msra.mxu0 0.0
    %284 = vmatpush.xpose.msra.mxu0 0.0
    %285 = vmatpush.xpose.msra.mxu0 0.0
    %286 = vmatpush.xpose.msra.mxu0 0.0
    %287 = vmatpush.xpose.msra.mxu0 0.0
    %288 = vmatpush.xpose.msra.mxu0 0.0
    %289 = vmatpush.xpose.msra.mxu0 0.0
    %290 = vmatpush.xpose.msra.mxu0 0.0
    %291 = vmatpush.xpose.msra.mxu0 0.0
    %292 = vmatpush.xpose.msra.mxu0 %v275
    %293 = vmatmul.f32.gmra.mxu0 %v273
    %v294 = vpop.f32.mrf.mxu0
    %v295 = vadd.f32 0.0, %v294
    %296 = vdwg.mxu0
    %297 = vrot.lane.b32.xlu0 %v137, 120
    %v298 = vpop.permute.xlu0 %297
    %v299 = vsel %vm142, %v137, 0
    %v301 = vsel %vm142, %v298, 0
    %303 = vmatpush.xpose.msra.mxu0 0.0
    %304 = vmatpush.xpose.msra.mxu0 0.0
    %305 = vmatpush.xpose.msra.mxu0 0.0
    %306 = vmatpush.xpose.msra.mxu0 0.0
    %307 = vmatpush.xpose.msra.mxu0 0.0
    %308 = vmatpush.xpose.msra.mxu0 0.0
    %309 = vmatpush.xpose.msra.mxu0 0.0
    %310 = vmatpush.xpose.msra.mxu0 0.0
    %311 = vmatpush.xpose.msra.mxu0 0.0
    %312 = vmatpush.xpose.msra.mxu0 0.0
    %313 = vmatpush.xpose.msra.mxu0 0.0
    %314 = vmatpush.xpose.msra.mxu0 0.0
    %315 = vmatpush.xpose.msra.mxu0 0.0
    %316 = vmatpush.xpose.msra.mxu0 0.0
    %317 = vmatpush.xpose.msra.mxu0 0.0
    %318 = vmatpush.xpose.msra.mxu0 %v301
    %319 = vmatmul.f32.gmra.mxu0 %v299
    %v320 = vpop.f32.mrf.mxu0
    %v321 = vadd.f32 0.0, %v320
    %322 = vdwg.mxu0
    %323 = vrot.lane.b32.xlu0 %v139, 120
    %v324 = vpop.permute.xlu0 %323
    %v325 = vsel %vm142, %v139, 0
    %v327 = vsel %vm142, %v324, 0
    %329 = vmatpush.xpose.msra.mxu0 0.0
    %330 = vmatpush.xpose.msra.mxu0 0.0
    %331 = vmatpush.xpose.msra.mxu0 0.0
    %332 = vmatpush.xpose.msra.mxu0 0.0
    %333 = vmatpush.xpose.msra.mxu0 0.0
    %334 = vmatpush.xpose.msra.mxu0 0.0
    %335 = vmatpush.xpose.msra.mxu0 0.0
    %336 = vmatpush.xpose.msra.mxu0 0.0
    %337 = vmatpush.xpose.msra.mxu0 0.0
    %338 = vmatpush.xpose.msra.mxu0 0.0
    %339 = vmatpush.xpose.msra.mxu0 0.0
    %340 = vmatpush.xpose.msra.mxu0 0.0
    %341 = vmatpush.xpose.msra.mxu0 0.0
    %342 = vmatpush.xpose.msra.mxu0 0.0
    %343 = vmatpush.xpose.msra.mxu0 0.0
    %344 = vmatpush.xpose.msra.mxu0 %v327
    %345 = vmatmul.f32.gmra.mxu0 %v325
    %v346 = vpop.f32.mrf.mxu0
    %v347 = vadd.f32 0.0, %v346
    %348 = vdwg.mxu0
    %v349 = vmul.f32 %v165, 0.35355338
    %v350 = vmul.f32 %v191, 0.35355338
    %v351 = vmul.f32 %v217, 0.35355338
    %v352 = vmul.f32 %v243, 0.35355338
    %v353 = vmul.f32 %v269, 0.35355338
    %v354 = vmul.f32 %v295, 0.35355338
    %v355 = vmul.f32 %v321, 0.35355338
    %v356 = vmul.f32 %v347, 0.35355338
    %v357 = vsel %vm142, %v349, -inf
    %358 = vmax.xlane.f32.xlu0 %v357
    %v359 = vpop.xlane.xlu0 %358
    %v360 = vsel %vm142, %v350, -inf
    %361 = vmax.xlane.f32.xlu0 %v360
    %v362 = vpop.xlane.xlu0 %361
    %v363 = vsel %vm142, %v351, -inf
    %364 = vmax.xlane.f32.xlu0 %v363
    %v365 = vpop.xlane.xlu0 %364
    %v366 = vsel %vm142, %v352, -inf
    %367 = vmax.xlane.f32.xlu0 %v366
    %v368 = vpop.xlane.xlu0 %367
    %v369 = vsel %vm142, %v353, -inf
    %370 = vmax.xlane.f32.xlu0 %v369
    %v371 = vpop.xlane.xlu0 %370
    %v372 = vsel %vm142, %v354, -inf
    %373 = vmax.xlane.f32.xlu0 %v372
    %v374 = vpop.xlane.xlu0 %373
    %v375 = vsel %vm142, %v355, -inf
    %376 = vmax.xlane.f32.xlu0 %v375
    %v377 = vpop.xlane.xlu0 %376
    %v378 = vsel %vm142, %v356, -inf
    %379 = vmax.xlane.f32.xlu0 %v378
    %v380 = vpop.xlane.xlu0 %379
    %v381 = vsub.f32 %v349, %v359
    %v382 = vsub.f32 %v350, %v362
    %v383 = vsub.f32 %v351, %v365
    %v384 = vsub.f32 %v352, %v368
    %v385 = vsub.f32 %v353, %v371
    %v386 = vsub.f32 %v354, %v374
    %v387 = vsub.f32 %v355, %v377
    %v388 = vsub.f32 %v356, %v380
    %v389 = vmul.f32 %v381, 1.442695
    %v390 = vpow.pop %v389
    %v391 = vmul.f32 %v382, 1.442695
    %v392 = vpow.pop %v391
    %v393 = vmul.f32 %v383, 1.442695
    %v394 = vpow.pop %v393
    %v395 = vmul.f32 %v384, 1.442695
    %v396 = vpow.pop %v395
    %v397 = vmul.f32 %v385, 1.442695
    %v398 = vpow.pop %v397
    %v399 = vmul.f32 %v386, 1.442695
    %v400 = vpow.pop %v399
    %v401 = vmul.f32 %v387, 1.442695
    %v402 = vpow.pop %v401
    %v403 = vmul.f32 %v388, 1.442695
    %v404 = vpow.pop %v403
    %v405 = vsel %vm142, %v390, 0.0
    %406 = vadd.xlane.f32.xlu0 %v405
    %v407 = vpop.xlane.xlu0 %406
    %v408 = vsel %vm142, %v392, 0.0
    %409 = vadd.xlane.f32.xlu0 %v408
    %v410 = vpop.xlane.xlu0 %409
    %v411 = vsel %vm142, %v394, 0.0
    %412 = vadd.xlane.f32.xlu0 %v411
    %v413 = vpop.xlane.xlu0 %412
    %v414 = vsel %vm142, %v396, 0.0
    %415 = vadd.xlane.f32.xlu0 %v414
    %v416 = vpop.xlane.xlu0 %415
    %v417 = vsel %vm142, %v398, 0.0
    %418 = vadd.xlane.f32.xlu0 %v417
    %v419 = vpop.xlane.xlu0 %418
    %v420 = vsel %vm142, %v400, 0.0
    %421 = vadd.xlane.f32.xlu0 %v420
    %v422 = vpop.xlane.xlu0 %421
    %v423 = vsel %vm142, %v402, 0.0
    %424 = vadd.xlane.f32.xlu0 %v423
    %v425 = vpop.xlane.xlu0 %424
    %v426 = vsel %vm142, %v404, 0.0
    %427 = vadd.xlane.f32.xlu0 %v426
    %v428 = vpop.xlane.xlu0 %427
    %v429 = vrcp.pop %v407
    %v430 = vmul.f32 %v407, %v429
    %v431 = vsub.f32 1.0, %v430
    %v432 = vmul.f32 %v429, %v431
    %v433 = vadd.f32 %v429, %v432
    %vm434 = vweird.f32 %v407
    %vm435 = vweird.f32 %v429
    %vm436 = vmor %vm434, %vm435
    %v437 = vsel %vm436, %v429, %v433
    %v438 = vand.u32 2147483647, %v407
    %vm439 = vcmp.eq.f32.partialorder %v438, 8.507059e+37
    %v440 = vand.u32 %v407, 2147483648
    %v441 = vor.u32 1.1754944e-38, %v440
    %v442 = vsel %vm439, %v441, %v437
    %v443 = vmul.f32 %v390, %v442
    %v444 = vrcp.pop %v410
    %v445 = vmul.f32 %v410, %v444
    %v446 = vsub.f32 1.0, %v445
    %v447 = vmul.f32 %v444, %v446
    %v448 = vadd.f32 %v444, %v447
    %vm449 = vweird.f32 %v410
    %vm450 = vweird.f32 %v444
    %vm451 = vmor %vm449, %vm450
    %v452 = vsel %vm451, %v444, %v448
    %v453 = vand.u32 2147483647, %v410
    %vm454 = vcmp.eq.f32.partialorder %v453, 8.507059e+37
    %v455 = vand.u32 %v410, 2147483648
    %v456 = vor.u32 1.1754944e-38, %v455
    %v457 = vsel %vm454, %v456, %v452
    %v458 = vmul.f32 %v392, %v457
    %v459 = vrcp.pop %v413
    %v460 = vmul.f32 %v413, %v459
    %v461 = vsub.f32 1.0, %v460
    %v462 = vmul.f32 %v459, %v461
    %v463 = vadd.f32 %v459, %v462
    %vm464 = vweird.f32 %v413
    %vm465 = vweird.f32 %v459
    %vm466 = vmor %vm464, %vm465
    %v467 = vsel %vm466, %v459, %v463
    %v468 = vand.u32 2147483647, %v413
    %vm469 = vcmp.eq.f32.partialorder %v468, 8.507059e+37
    %v470 = vand.u32 %v413, 2147483648
    %v471 = vor.u32 1.1754944e-38, %v470
    %v472 = vsel %vm469, %v471, %v467
    %v473 = vmul.f32 %v394, %v472
    %v474 = vrcp.pop %v416
    %v475 = vmul.f32 %v416, %v474
    %v476 = vsub.f32 1.0, %v475
    %v477 = vmul.f32 %v474, %v476
    %v478 = vadd.f32 %v474, %v477
    %vm479 = vweird.f32 %v416
    %vm480 = vweird.f32 %v474
    %vm481 = vmor %vm479, %vm480
    %v482 = vsel %vm481, %v474, %v478
    %v483 = vand.u32 2147483647, %v416
    %vm484 = vcmp.eq.f32.partialorder %v483, 8.507059e+37
    %v485 = vand.u32 %v416, 2147483648
    %v486 = vor.u32 1.1754944e-38, %v485
    %v487 = vsel %vm484, %v486, %v482
    %v488 = vmul.f32 %v396, %v487
    %v489 = vrcp.pop %v419
    %v490 = vmul.f32 %v419, %v489
    %v491 = vsub.f32 1.0, %v490
    %v492 = vmul.f32 %v489, %v491
    %v493 = vadd.f32 %v489, %v492
    %vm494 = vweird.f32 %v419
    %vm495 = vweird.f32 %v489
    %vm496 = vmor %vm494, %vm495
    %v497 = vsel %vm496, %v489, %v493
    %v498 = vand.u32 2147483647, %v419
    %vm499 = vcmp.eq.f32.partialorder %v498, 8.507059e+37
    %v500 = vand.u32 %v419, 2147483648
    %v501 = vor.u32 1.1754944e-38, %v500
    %v502 = vsel %vm499, %v501, %v497
    %v503 = vmul.f32 %v398, %v502
    %v504 = vrcp.pop %v422
    %v505 = vmul.f32 %v422, %v504
    %v506 = vsub.f32 1.0, %v505
    %v507 = vmul.f32 %v504, %v506
    %v508 = vadd.f32 %v504, %v507
    %vm509 = vweird.f32 %v422
    %vm510 = vweird.f32 %v504
    %vm511 = vmor %vm509, %vm510
    %v512 = vsel %vm511, %v504, %v508
    %v513 = vand.u32 2147483647, %v422
    %vm514 = vcmp.eq.f32.partialorder %v513, 8.507059e+37
    %v515 = vand.u32 %v422, 2147483648
    %v516 = vor.u32 1.1754944e-38, %v515
    %v517 = vsel %vm514, %v516, %v512
    %v518 = vmul.f32 %v400, %v517
    %v519 = vrcp.pop %v425
    %v520 = vmul.f32 %v425, %v519
    %v521 = vsub.f32 1.0, %v520
    %v522 = vmul.f32 %v519, %v521
    %v523 = vadd.f32 %v519, %v522
    %vm524 = vweird.f32 %v425
    %vm525 = vweird.f32 %v519
    %vm526 = vmor %vm524, %vm525
    %v527 = vsel %vm526, %v519, %v523
    %v528 = vand.u32 2147483647, %v425
    %vm529 = vcmp.eq.f32.partialorder %v528, 8.507059e+37
    %v530 = vand.u32 %v425, 2147483648
    %v531 = vor.u32 1.1754944e-38, %v530
    %v532 = vsel %vm529, %v531, %v527
    %v533 = vmul.f32 %v402, %v532
    %v534 = vrcp.pop %v428
    %v535 = vmul.f32 %v428, %v534
    %v536 = vsub.f32 1.0, %v535
    %v537 = vmul.f32 %v534, %v536
    %v538 = vadd.f32 %v534, %v537
    %vm539 = vweird.f32 %v428
    %vm540 = vweird.f32 %v534
    %vm541 = vmor %vm539, %vm540
    %v542 = vsel %vm541, %v534, %v538
    %v543 = vand.u32 2147483647, %v428
    %vm544 = vcmp.eq.f32.partialorder %v543, 8.507059e+37
    %v545 = vand.u32 %v428, 2147483648
    %v546 = vor.u32 1.1754944e-38, %v545
    %v547 = vsel %vm544, %v546, %v542
    %v548 = vmul.f32 %v404, %v547
    %549 = vrot.lane.b32.xlu0 %v121, 112
    %v550 = vpop.permute.xlu0 %549
    %v553 = vsel %vm142, %v443, 0
    %555 = vmatpush.msra.mxu0 0.0
    %556 = vmatpush.msra.mxu0 0.0
    %557 = vmatpush.msra.mxu0 0.0
    %558 = vmatpush.msra.mxu0 0.0
    %559 = vmatpush.msra.mxu0 0.0
    %560 = vmatpush.msra.mxu0 0.0
    %561 = vmatpush.msra.mxu0 0.0
    %562 = vmatpush.msra.mxu0 0.0
    %563 = vmatpush.msra.mxu0 0.0
    %564 = vmatpush.msra.mxu0 0.0
    %565 = vmatpush.msra.mxu0 0.0
    %566 = vmatpush.msra.mxu0 0.0
    %567 = vmatpush.msra.mxu0 0.0
    %568 = vmatpush.msra.mxu0 0.0
    %569 = vmatpush.msra.mxu0 0.0
    %570 = vmatpush.msra.mxu0 %v550
    %571 = vmatmul.f32.gmra.mxu0 %v553
    %v572 = vpop.f32.mrf.mxu0
    %v573 = vadd.f32 0.0, %v572
    %574 = vdwg.mxu0
    %575 = vrot.lane.b32.xlu0 %v124, 112
    %v576 = vpop.permute.xlu0 %575
    %v579 = vsel %vm142, %v458, 0
    %581 = vmatpush.msra.mxu0 0.0
    %582 = vmatpush.msra.mxu0 0.0
    %583 = vmatpush.msra.mxu0 0.0
    %584 = vmatpush.msra.mxu0 0.0
    %585 = vmatpush.msra.mxu0 0.0
    %586 = vmatpush.msra.mxu0 0.0
    %587 = vmatpush.msra.mxu0 0.0
    %588 = vmatpush.msra.mxu0 0.0
    %589 = vmatpush.msra.mxu0 0.0
    %590 = vmatpush.msra.mxu0 0.0
    %591 = vmatpush.msra.mxu0 0.0
    %592 = vmatpush.msra.mxu0 0.0
    %593 = vmatpush.msra.mxu0 0.0
    %594 = vmatpush.msra.mxu0 0.0
    %595 = vmatpush.msra.mxu0 0.0
    %596 = vmatpush.msra.mxu0 %v576
    %597 = vmatmul.f32.gmra.mxu0 %v579
    %v598 = vpop.f32.mrf.mxu0
    %v599 = vadd.f32 0.0, %v598
    %600 = vdwg.mxu0
    %601 = vrot.lane.b32.xlu0 %v129, 112
    %v602 = vpop.permute.xlu0 %601
    %v605 = vsel %vm142, %v473, 0
    %607 = vmatpush.msra.mxu0 0.0
    %608 = vmatpush.msra.mxu0 0.0
    %609 = vmatpush.msra.mxu0 0.0
    %610 = vmatpush.msra.mxu0 0.0
    %611 = vmatpush.msra.mxu0 0.0
    %612 = vmatpush.msra.mxu0 0.0
    %613 = vmatpush.msra.mxu0 0.0
    %614 = vmatpush.msra.mxu0 0.0
    %615 = vmatpush.msra.mxu0 0.0
    %616 = vmatpush.msra.mxu0 0.0
    %617 = vmatpush.msra.mxu0 0.0
    %618 = vmatpush.msra.mxu0 0.0
    %619 = vmatpush.msra.mxu0 0.0
    %620 = vmatpush.msra.mxu0 0.0
    %621 = vmatpush.msra.mxu0 0.0
    %622 = vmatpush.msra.mxu0 %v602
    %623 = vmatmul.f32.gmra.mxu0 %v605
    %v624 = vpop.f32.mrf.mxu0
    %v625 = vadd.f32 0.0, %v624
    %626 = vdwg.mxu0
    %627 = vrot.lane.b32.xlu0 %v131, 112
    %v628 = vpop.permute.xlu0 %627
    %v631 = vsel %vm142, %v488, 0
    %633 = vmatpush.msra.mxu0 0.0
    %634 = vmatpush.msra.mxu0 0.0
    %635 = vmatpush.msra.mxu0 0.0
    %636 = vmatpush.msra.mxu0 0.0
    %637 = vmatpush.msra.mxu0 0.0
    %638 = vmatpush.msra.mxu0 0.0
    %639 = vmatpush.msra.mxu0 0.0
    %640 = vmatpush.msra.mxu0 0.0
    %641 = vmatpush.msra.mxu0 0.0
    %642 = vmatpush.msra.mxu0 0.0
    %643 = vmatpush.msra.mxu0 0.0
    %644 = vmatpush.msra.mxu0 0.0
    %645 = vmatpush.msra.mxu0 0.0
    %646 = vmatpush.msra.mxu0 0.0
    %647 = vmatpush.msra.mxu0 0.0
    %648 = vmatpush.msra.mxu0 %v628
    %649 = vmatmul.f32.gmra.mxu0 %v631
    %v650 = vpop.f32.mrf.mxu0
    %v651 = vadd.f32 0.0, %v650
    %652 = vdwg.mxu0
    %653 = vrot.lane.b32.xlu0 %v133, 112
    %v654 = vpop.permute.xlu0 %653
    %v657 = vsel %vm142, %v503, 0
    %659 = vmatpush.msra.mxu0 0.0
    %660 = vmatpush.msra.mxu0 0.0
    %661 = vmatpush.msra.mxu0 0.0
    %662 = vmatpush.msra.mxu0 0.0
    %663 = vmatpush.msra.mxu0 0.0
    %664 = vmatpush.msra.mxu0 0.0
    %665 = vmatpush.msra.mxu0 0.0
    %666 = vmatpush.msra.mxu0 0.0
    %667 = vmatpush.msra.mxu0 0.0
    %668 = vmatpush.msra.mxu0 0.0
    %669 = vmatpush.msra.mxu0 0.0
    %670 = vmatpush.msra.mxu0 0.0
    %671 = vmatpush.msra.mxu0 0.0
    %672 = vmatpush.msra.mxu0 0.0
    %673 = vmatpush.msra.mxu0 0.0
    %674 = vmatpush.msra.mxu0 %v654
    %675 = vmatmul.f32.gmra.mxu0 %v657
    %v676 = vpop.f32.mrf.mxu0
    %v677 = vadd.f32 0.0, %v676
    %678 = vdwg.mxu0
    %679 = vrot.lane.b32.xlu0 %v135, 112
    %v680 = vpop.permute.xlu0 %679
    %v683 = vsel %vm142, %v518, 0
    %685 = vmatpush.msra.mxu0 0.0
    %686 = vmatpush.msra.mxu0 0.0
    %687 = vmatpush.msra.mxu0 0.0
    %688 = vmatpush.msra.mxu0 0.0
    %689 = vmatpush.msra.mxu0 0.0
    %690 = vmatpush.msra.mxu0 0.0
    %691 = vmatpush.msra.mxu0 0.0
    %692 = vmatpush.msra.mxu0 0.0
    %693 = vmatpush.msra.mxu0 0.0
    %694 = vmatpush.msra.mxu0 0.0
    %695 = vmatpush.msra.mxu0 0.0
    %696 = vmatpush.msra.mxu0 0.0
    %697 = vmatpush.msra.mxu0 0.0
    %698 = vmatpush.msra.mxu0 0.0
    %699 = vmatpush.msra.mxu0 0.0
    %700 = vmatpush.msra.mxu0 %v680
    %701 = vmatmul.f32.gmra.mxu0 %v683
    %v702 = vpop.f32.mrf.mxu0
    %v703 = vadd.f32 0.0, %v702
    %704 = vdwg.mxu0
    %705 = vrot.lane.b32.xlu0 %v137, 112
    %v706 = vpop.permute.xlu0 %705
    %v709 = vsel %vm142, %v533, 0
    %711 = vmatpush.msra.mxu0 0.0
    %712 = vmatpush.msra.mxu0 0.0
    %713 = vmatpush.msra.mxu0 0.0
    %714 = vmatpush.msra.mxu0 0.0
    %715 = vmatpush.msra.mxu0 0.0
    %716 = vmatpush.msra.mxu0 0.0
    %717 = vmatpush.msra.mxu0 0.0
    %718 = vmatpush.msra.mxu0 0.0
    %719 = vmatpush.msra.mxu0 0.0
    %720 = vmatpush.msra.mxu0 0.0
    %721 = vmatpush.msra.mxu0 0.0
    %722 = vmatpush.msra.mxu0 0.0
    %723 = vmatpush.msra.mxu0 0.0
    %724 = vmatpush.msra.mxu0 0.0
    %725 = vmatpush.msra.mxu0 0.0
    %726 = vmatpush.msra.mxu0 %v706
    %727 = vmatmul.f32.gmra.mxu0 %v709
    %v728 = vpop.f32.mrf.mxu0
    %v729 = vadd.f32 0.0, %v728
    %730 = vdwg.mxu0
    %731 = vrot.lane.b32.xlu0 %v139, 112
    %v732 = vpop.permute.xlu0 %731
    %v735 = vsel %vm142, %v548, 0
    %737 = vmatpush.msra.mxu0 0.0
    %738 = vmatpush.msra.mxu0 0.0
    %739 = vmatpush.msra.mxu0 0.0
    %740 = vmatpush.msra.mxu0 0.0
    %741 = vmatpush.msra.mxu0 0.0
    %742 = vmatpush.msra.mxu0 0.0
    %743 = vmatpush.msra.mxu0 0.0
    %744 = vmatpush.msra.mxu0 0.0
    %745 = vmatpush.msra.mxu0 0.0
    %746 = vmatpush.msra.mxu0 0.0
    %747 = vmatpush.msra.mxu0 0.0
    %748 = vmatpush.msra.mxu0 0.0
    %749 = vmatpush.msra.mxu0 0.0
    %750 = vmatpush.msra.mxu0 0.0
    %751 = vmatpush.msra.mxu0 0.0
    %752 = vmatpush.msra.mxu0 %v732
    %753 = vmatmul.f32.gmra.mxu0 %v735
    %v754 = vpop.f32.mrf.mxu0
    %v755 = vadd.f32 0.0, %v754
    %756 = vdwg.mxu0
    %759 = vrot.lane.b32.xlu0 %v625, 8
    %v760 = vpop.permute.xlu0 %759
    %761 = vrot.lane.b32.xlu0 %v651, 8
    %v762 = vpop.permute.xlu0 %761
    %767 = vrot.lane.b32.xlu0 %v677, 16
    %v768 = vpop.permute.xlu0 %767
    %769 = vrot.lane.b32.xlu0 %v703, 16
    %v770 = vpop.permute.xlu0 %769
    %775 = vrot.lane.b32.xlu0 %v729, 24
    %v776 = vpop.permute.xlu0 %775
    %777 = vrot.lane.b32.xlu0 %v755, 24
    %v778 = vpop.permute.xlu0 %777
    %v781 = vsel %vm142, %v573, %v760
    %v782 = vsel %vm142, %v599, %v762
    %vm783 = vcmask 130048
    %v784 = vsel %vm783, %v781, %v768
    %v785 = vsel %vm783, %v782, %v770
    %vm786 = vcmask 195584
    %v787 = vsel %vm786, %v784, %v776
    %v788 = vsel %vm786, %v785, %v778
    %789 = vrot.lane.b32.xlu0 %v87, 64
    %v790 = vpop.permute.xlu0 %789
    %v793 = vsel %vm35, %v787, 0
    %v796 = vsel %vm35, %v788, 0
    %798 = vmatpush.msra.mxu0 0.0
    %799 = vmatpush.msra.mxu0 0.0
    %800 = vmatpush.msra.mxu0 0.0
    %801 = vmatpush.msra.mxu0 0.0
    %802 = vmatpush.msra.mxu0 0.0
    %803 = vmatpush.msra.mxu0 0.0
    %804 = vmatpush.msra.mxu0 0.0
    %805 = vmatpush.msra.mxu0 0.0
    %806 = vmatpush.msra.mxu0 0.0
    %807 = vmatpush.msra.mxu0 0.0
    %808 = vmatpush.msra.mxu0 0.0
    %809 = vmatpush.msra.mxu0 0.0
    %810 = vmatpush.msra.mxu0 %v21
    %811 = vmatpush.msra.mxu0 %v20
    %812 = vmatpush.msra.mxu0 %v19
    %813 = vmatpush.msra.mxu0 %v18
    %814 = vmatmul.f32.gmra.mxu0 %v793
    %v815 = vpop.f32.mrf.mxu0
    %v816 = vadd.f32 %v790, %v815
    %817 = vmatmul.f32.gmra.mxu0 %v796
    %v818 = vpop.f32.mrf.mxu0
    %v819 = vadd.f32 %v790, %v818
    %820 = vdwg.mxu0
    %v821 = vadd.f32 %v816, %v12
    %v822 = vadd.f32 %v819, %v13
    %v823 = vsel %vm35, %v821, 0.0
    %824 = vadd.xlane.f32.xlu0 %v823
    %v825 = vpop.xlane.xlu0 %824
    %v826 = vsel %vm35, %v822, 0.0
    %827 = vadd.xlane.f32.xlu0 %v826
    %v828 = vpop.xlane.xlu0 %827
    %v829 = vmul.f32 %v825, %v48
    %v830 = vmul.f32 %v828, %v48
    %v831 = vsub.f32 %v821, %v829
    %v832 = vsub.f32 %v822, %v830
    %v833 = vmul.f32 %v831, %v831
    %v834 = vmul.f32 %v832, %v832
    %v835 = vsel %vm35, %v833, 0.0
    %836 = vadd.xlane.f32.xlu0 %v835
    %v837 = vpop.xlane.xlu0 %836
    %v838 = vsel %vm35, %v834, 0.0
    %839 = vadd.xlane.f32.xlu0 %v838
    %v840 = vpop.xlane.xlu0 %839
    %v841 = vmul.f32 %v837, %v48
    %v842 = vmul.f32 %v840, %v48
    %v843 = vadd.f32 %v841, 1e-06
    %v844 = vadd.f32 %v842, 1e-06
    %v845 = vrsqrt.pop %v843
    %v846 = vmul.f32 %v845, %v843
    %v847 = vmul.f32 %v846, %v845
    %v848 = vmul.f32 0.5, %v847
    %v849 = vsub.f32 1.5, %v848
    %v850 = vmul.f32 %v845, %v849
    %vm851 = vweird.f32 %v843
    %vm852 = vweird.f32 %v845
    %vm853 = vmor %vm851, %vm852
    %v854 = vsel %vm853, %v845, %v850
    %v855 = vrsqrt.pop %v844
    %v856 = vmul.f32 %v855, %v844
    %v857 = vmul.f32 %v856, %v855
    %v858 = vmul.f32 0.5, %v857
    %v859 = vsub.f32 1.5, %v858
    %v860 = vmul.f32 %v855, %v859
    %vm861 = vweird.f32 %v844
    %vm862 = vweird.f32 %v855
    %vm863 = vmor %vm861, %vm862
    %v864 = vsel %vm863, %v855, %v860
    %v865 = vmul.f32 %v831, %v854
    %v866 = vmul.f32 %v832, %v864
    %v867 = vperm.slane %v34, 2
    %v868 = vmul.f32 %v865, %v867
    %v869 = vmul.f32 %v866, %v867
    %871 = vrot.lane.b32.xlu0 %v867, 96
    %v872 = vpop.permute.xlu0 %871
    %v874 = vadd.f32 %v868, %v872
    %v875 = vadd.f32 %v869, %v872
    %v876 = vperm.slane %v34, 3
    %v878 = vsel %vm35, %v874, 0
    %v881 = vsel %vm35, %v875, 0
    %883 = vmatpush.msra.mxu0 0.0
    %884 = vmatpush.msra.mxu0 0.0
    %885 = vmatpush.msra.mxu0 0.0
    %886 = vmatpush.msra.mxu0 0.0
    %887 = vmatpush.msra.mxu0 0.0
    %888 = vmatpush.msra.mxu0 0.0
    %889 = vmatpush.msra.mxu0 0.0
    %890 = vmatpush.msra.mxu0 0.0
    %891 = vmatpush.msra.mxu0 0.0
    %892 = vmatpush.msra.mxu0 0.0
    %893 = vmatpush.msra.mxu0 0.0
    %894 = vmatpush.msra.mxu0 0.0
    %895 = vmatpush.msra.mxu0 %v25
    %896 = vmatpush.msra.mxu0 %v24
    %897 = vmatpush.msra.mxu0 %v23
    %898 = vmatpush.msra.mxu0 %v22
    %899 = vmatmul.f32.gmra.mxu0 %v878
    %v900 = vpop.f32.mrf.mxu0
    %v901 = vadd.f32 %v876, %v900
    %902 = vmatmul.f32.gmra.mxu0 %v881
    %v903 = vpop.f32.mrf.mxu0
    %v904 = vadd.f32 %v876, %v903
    %905 = vdwg.mxu0
    %v906 = vmul.f32 %v901, 0.5
    %v907 = vmul.f32 %v904, 0.5
    %v908 = vmul.f32 %v901, 0.044715
    %v909 = vmul.f32 %v904, 0.044715
    %v910 = vmul.f32 %v908, %v901
    %v911 = vmul.f32 %v909, %v904
    %v912 = vmul.f32 %v910, %v901
    %v913 = vmul.f32 %v911, %v904
    %v914 = vadd.f32 %v901, %v912
    %v915 = vadd.f32 %v904, %v913
    %v916 = vmul.f32 %v914, 0.7978846
    %v917 = vmul.f32 %v915, 0.7978846
    %v918 = vtanh.pop %v916
    %v919 = vtanh.pop %v917
    %v920 = vadd.f32 %v918, 1.0
    %v921 = vadd.f32 %v919, 1.0
    %v922 = vmul.f32 %v906, %v920
    %v923 = vmul.f32 %v907, %v921
    %924 = vrot.lane.b32.xlu0 %v867, 64
    %v925 = vpop.permute.xlu0 %924
    %vm927 = vcmask 523264
    %v929 = vsel %vm927, %v922, 0
    %v932 = vsel %vm927, %v923, 0
    %934 = vmatpush.msra.mxu0 0.0
    %935 = vmatpush.msra.mxu0 0.0
    %936 = vmatpush.msra.mxu0 0.0
    %937 = vmatpush.msra.mxu0 0.0
    %938 = vmatpush.msra.mxu0 0.0
    %939 = vmatpush.msra.mxu0 0.0
    %940 = vmatpush.msra.mxu0 0.0
    %941 = vmatpush.msra.mxu0 0.0
    %942 = vmatpush.msra.mxu0 %v33
    %943 = vmatpush.msra.mxu0 %v32
    %944 = vmatpush.msra.mxu0 %v31
    %945 = vmatpush.msra.mxu0 %v30
    %946 = vmatpush.msra.mxu0 %v29
    %947 = vmatpush.msra.mxu0 %v28
    %948 = vmatpush.msra.mxu0 %v27
    %949 = vmatpush.msra.mxu0 %v26
    %950 = vmatmul.f32.gmra.mxu0 %v929
    %v951 = vpop.f32.mrf.mxu0
    %v952 = vadd.f32 %v925, %v951
    %953 = vmatmul.f32.gmra.mxu0 %v932
    %v954 = vpop.f32.mrf.mxu0
    %v955 = vadd.f32 %v925, %v954
    %956 = vdwg.mxu0
    %v957 = vadd.f32 %v952, %v821
    %v958 = vadd.f32 %v955, %v822
    %v959 = vld [vmem:[%s1 + $0xa8] sm:$0xff]
    %v960 = vld [vmem:[%s1 + $0xb0] sm:$0xff]
    %v961 = vld [vmem:[%s1 + $0xb8] sm:$0xff]
    %v962 = vld [vmem:[%s1 + $0xc0] sm:$0xff]
    %v963 = vld [vmem:[%s1 + $0xc8] sm:$0xff]
    %v964 = vld [vmem:[%s1 + $0xd0] sm:$0xff]
    %v965 = vld [vmem:[%s1 + $0xd8] sm:$0xff]
    %v966 = vld [vmem:[%s1 + $0xe0] sm:$0xff]
    %v967 = vld [vmem:[%s1 + $0xe8] sm:$0xff]
    %v968 = vld [vmem:[%s1 + $0xf0] sm:$0xff]
    %v969 = vld [vmem:[%s1 + $0xf8] sm:$0xff]
    %v970 = vld [vmem:[%s1 + $0x100] sm:$0xff]
    %v971 = vld [vmem:[%s1 + $0x108] sm:$0xff]
    %v972 = vld [vmem:[%s1 + $0x110] sm:$0xff]
    %v973 = vld [vmem:[%s1 + $0x118] sm:$0xff]
    %v974 = vld [vmem:[%s1 + $0x120] sm:$0xff]
    %v975 = vld [vmem:[%s1 + $0x128] sm:$0xff]
    %v976 = vld [vmem:[%s1 + $0x130] sm:$0xff]
    %v977 = vld [vmem:[%s1 + $0x138] sm:$0xff]
    %v978 = vld [vmem:[%s1 + $0x140] sm:$0xff]
    %v979 = vld [vmem:[%s1 + $0x148] sm:$0xff]
    %v980 = vsel %vm35, %v957, 0.0
    %981 = vadd.xlane.f32.xlu0 %v980
    %v982 = vpop.xlane.xlu0 %981
    %v983 = vsel %vm35, %v958, 0.0
    %984 = vadd.xlane.f32.xlu0 %v983
    %v985 = vpop.xlane.xlu0 %984
    %v986 = vmul.f32 %v982, %v48
    %v987 = vmul.f32 %v985, %v48
    %v988 = vsub.f32 %v957, %v986
    %v989 = vsub.f32 %v958, %v987
    %v990 = vmul.f32 %v988, %v988
    %v991 = vmul.f32 %v989, %v989
    %v992 = vsel %vm35, %v990, 0.0
    %993 = vadd.xlane.f32.xlu0 %v992
    %v994 = vpop.xlane.xlu0 %993
    %v995 = vsel %vm35, %v991, 0.0
    %996 = vadd.xlane.f32.xlu0 %v995
    %v997 = vpop.xlane.xlu0 %996
    %v998 = vmul.f32 %v994, %v48
    %v999 = vmul.f32 %v997, %v48
    %v1000 = vadd.f32 %v998, 1e-06
    %v1001 = vadd.f32 %v999, 1e-06
    %v1002 = vrsqrt.pop %v1000
    %v1003 = vmul.f32 %v1002, %v1000
    %v1004 = vmul.f32 %v1003, %v1002
    %v1005 = vmul.f32 0.5, %v1004
    %v1006 = vsub.f32 1.5, %v1005
    %v1007 = vmul.f32 %v1002, %v1006
    %vm1008 = vweird.f32 %v1000
    %vm1009 = vweird.f32 %v1002
    %vm1010 = vmor %vm1008, %vm1009
    %v1011 = vsel %vm1010, %v1002, %v1007
    %v1012 = vrsqrt.pop %v1001
    %v1013 = vmul.f32 %v1012, %v1001
    %v1014 = vmul.f32 %v1013, %v1012
    %v1015 = vmul.f32 0.5, %v1014
    %v1016 = vsub.f32 1.5, %v1015
    %v1017 = vmul.f32 %v1012, %v1016
    %vm1018 = vweird.f32 %v1001
    %vm1019 = vweird.f32 %v1012
    %vm1020 = vmor %vm1018, %vm1019
    %v1021 = vsel %vm1020, %v1012, %v1017
    %v1022 = vmul.f32 %v988, %v1011
    %v1023 = vmul.f32 %v989, %v1021
    %v1024 = vperm.slane %v979, 1
    %v1025 = vmul.f32 %v1022, %v1024
    %v1026 = vmul.f32 %v1023, %v1024
    %1028 = vrot.lane.b32.xlu0 %v1024, 96
    %v1029 = vpop.permute.xlu0 %1028
    %v1031 = vadd.f32 %v1025, %v1029
    %v1032 = vadd.f32 %v1026, %v1029
    %v1033 = vperm.slane %v979, 0
    %v1035 = vsel %vm35, %v1031, 0
    %v1038 = vsel %vm35, %v1032, 0
    %1040 = vmatpush.msra.mxu0 0.0
    %1041 = vmatpush.msra.mxu0 0.0
    %1042 = vmatpush.msra.mxu0 0.0
    %1043 = vmatpush.msra.mxu0 0.0
    %1044 = vmatpush.msra.mxu0 0.0
    %1045 = vmatpush.msra.mxu0 0.0
    %1046 = vmatpush.msra.mxu0 0.0
    %1047 = vmatpush.msra.mxu0 0.0
    %1048 = vmatpush.msra.mxu0 0.0
    %1049 = vmatpush.msra.mxu0 0.0
    %1050 = vmatpush.msra.mxu0 0.0
    %1051 = vmatpush.msra.mxu0 0.0
    %1052 = vmatpush.msra.mxu0 %v962
    %1053 = vmatpush.msra.mxu0 %v961
    %1054 = vmatpush.msra.mxu0 %v960
    %1055 = vmatpush.msra.mxu0 %v959
    %1056 = vmatmul.f32.gmra.mxu0 %v1035
    %v1057 = vpop.f32.mrf.mxu0
    %v1058 = vadd.f32 %v1033, %v1057
    %1059 = vmatmul.f32.gmra.mxu0 %v1038
    %v1060 = vpop.f32.mrf.mxu0
    %v1061 = vadd.f32 %v1033, %v1060
    %1062 = vdwg.mxu0
    %1065 = vrot.lane.b32.xlu0 %v1058, 104
    %v1066 = vpop.permute.xlu0 %1065
    %1067 = vrot.lane.b32.xlu0 %v1061, 104
    %v1068 = vpop.permute.xlu0 %1067
    %1069 = vrot.lane.b32.xlu0 %v1058, 80
    %v1070 = vpop.permute.xlu0 %1069
    %1071 = vrot.lane.b32.xlu0 %v1061, 80
    %v1072 = vpop.permute.xlu0 %1071
    %1073 = vrot.lane.b32.xlu0 %v1058, 56
    %v1074 = vpop.permute.xlu0 %1073
    %1075 = vrot.lane.b32.xlu0 %v1061, 56
    %v1076 = vpop.permute.xlu0 %1075
    %1077 = vrot.lane.b32.xlu0 %v1058, 120
    %v1078 = vpop.permute.xlu0 %1077
    %v1079 = vsel %vm142, %v1058, 0
    %v1081 = vsel %vm142, %v1078, 0
    %1083 = vmatpush.xpose.msra.mxu0 0.0
    %1084 = vmatpush.xpose.msra.mxu0 0.0
    %1085 = vmatpush.xpose.msra.mxu0 0.0
    %1086 = vmatpush.xpose.msra.mxu0 0.0
    %1087 = vmatpush.xpose.msra.mxu0 0.0
    %1088 = vmatpush.xpose.msra.mxu0 0.0
    %1089 = vmatpush.xpose.msra.mxu0 0.0
    %1090 = vmatpush.xpose.msra.mxu0 0.0
    %1091 = vmatpush.xpose.msra.mxu0 0.0
    %1092 = vmatpush.xpose.msra.mxu0 0.0
    %1093 = vmatpush.xpose.msra.mxu0 0.0
    %1094 = vmatpush.xpose.msra.mxu0 0.0
    %1095 = vmatpush.xpose.msra.mxu0 0.0
    %1096 = vmatpush.xpose.msra.mxu0 0.0
    %1097 = vmatpush.xpose.msra.mxu0 0.0
    %1098 = vmatpush.xpose.msra.mxu0 %v1081
    %1099 = vmatmul.f32.gmra.mxu0 %v1079
    %v1100 = vpop.f32.mrf.mxu0
    %v1101 = vadd.f32 0.0, %v1100
    %1102 = vdwg.mxu0
    %1103 = vrot.lane.b32.xlu0 %v1061, 120
    %v1104 = vpop.permute.xlu0 %1103
    %v1105 = vsel %vm142, %v1061, 0
    %v1107 = vsel %vm142, %v1104, 0
    %1109 = vmatpush.xpose.msra.mxu0 0.0
    %1110 = vmatpush.xpose.msra.mxu0 0.0
    %1111 = vmatpush.xpose.msra.mxu0 0.0
    %1112 = vmatpush.xpose.msra.mxu0 0.0
    %1113 = vmatpush.xpose.msra.mxu0 0.0
    %1114 = vmatpush.xpose.msra.mxu0 0.0
    %1115 = vmatpush.xpose.msra.mxu0 0.0
    %1116 = vmatpush.xpose.msra.mxu0 0.0
    %1117 = vmatpush.xpose.msra.mxu0 0.0
    %1118 = vmatpush.xpose.msra.mxu0 0.0
    %1119 = vmatpush.xpose.msra.mxu0 0.0
    %1120 = vmatpush.xpose.msra.mxu0 0.0
    %1121 = vmatpush.xpose.msra.mxu0 0.0
    %1122 = vmatpush.xpose.msra.mxu0 0.0
    %1123 = vmatpush.xpose.msra.mxu0 0.0
    %1124 = vmatpush.xpose.msra.mxu0 %v1107
    %1125 = vmatmul.f32.gmra.mxu0 %v1105
    %v1126 = vpop.f32.mrf.mxu0
    %v1127 = vadd.f32 0.0, %v1126
    %1128 = vdwg.mxu0
    %1129 = vrot.lane.b32.xlu0 %v1066, 120
    %v1130 = vpop.permute.xlu0 %1129
    %v1131 = vsel %vm142, %v1066, 0
    %v1133 = vsel %vm142, %v1130, 0
    %1135 = vmatpush.xpose.msra.mxu0 0.0
    %1136 = vmatpush.xpose.msra.mxu0 0.0
    %1137 = vmatpush.xpose.msra.mxu0 0.0
    %1138 = vmatpush.xpose.msra.mxu0 0.0
    %1139 = vmatpush.xpose.msra.mxu0 0.0
    %1140 = vmatpush.xpose.msra.mxu0 0.0
    %1141 = vmatpush.xpose.msra.mxu0 0.0
    %1142 = vmatpush.xpose.msra.mxu0 0.0
    %1143 = vmatpush.xpose.msra.mxu0 0.0
    %1144 = vmatpush.xpose.msra.mxu0 0.0
    %1145 = vmatpush.xpose.msra.mxu0 0.0
    %1146 = vmatpush.xpose.msra.mxu0 0.0
    %1147 = vmatpush.xpose.msra.mxu0 0.0
    %1148 = vmatpush.xpose.msra.mxu0 0.0
    %1149 = vmatpush.xpose.msra.mxu0 0.0
    %1150 = vmatpush.xpose.msra.mxu0 %v1133
    %1151 = vmatmul.f32.gmra.mxu0 %v1131
    %v1152 = vpop.f32.mrf.mxu0
    %v1153 = vadd.f32 0.0, %v1152
    %1154 = vdwg.mxu0
    %1155 = vrot.lane.b32.xlu0 %v1068, 120
    %v1156 = vpop.permute.xlu0 %1155
    %v1157 = vsel %vm142, %v1068, 0
    %v1159 = vsel %vm142, %v1156, 0
    %1161 = vmatpush.xpose.msra.mxu0 0.0
    %1162 = vmatpush.xpose.msra.mxu0 0.0
    %1163 = vmatpush.xpose.msra.mxu0 0.0
    %1164 = vmatpush.xpose.msra.mxu0 0.0
    %1165 = vmatpush.xpose.msra.mxu0 0.0
    %1166 = vmatpush.xpose.msra.mxu0 0.0
    %1167 = vmatpush.xpose.msra.mxu0 0.0
    %1168 = vmatpush.xpose.msra.mxu0 0.0
    %1169 = vmatpush.xpose.msra.mxu0 0.0
    %1170 = vmatpush.xpose.msra.mxu0 0.0
    %1171 = vmatpush.xpose.msra.mxu0 0.0
    %1172 = vmatpush.xpose.msra.mxu0 0.0
    %1173 = vmatpush.xpose.msra.mxu0 0.0
    %1174 = vmatpush.xpose.msra.mxu0 0.0
    %1175 = vmatpush.xpose.msra.mxu0 0.0
    %1176 = vmatpush.xpose.msra.mxu0 %v1159
    %1177 = vmatmul.f32.gmra.mxu0 %v1157
    %v1178 = vpop.f32.mrf.mxu0
    %v1179 = vadd.f32 0.0, %v1178
    %1180 = vdwg.mxu0
    %1181 = vrot.lane.b32.xlu0 %v1070, 120
    %v1182 = vpop.permute.xlu0 %1181
    %v1183 = vsel %vm142, %v1070, 0
    %v1185 = vsel %vm142, %v1182, 0
    %1187 = vmatpush.xpose.msra.mxu0 0.0
    %1188 = vmatpush.xpose.msra.mxu0 0.0
    %1189 = vmatpush.xpose.msra.mxu0 0.0
    %1190 = vmatpush.xpose.msra.mxu0 0.0
    %1191 = vmatpush.xpose.msra.mxu0 0.0
    %1192 = vmatpush.xpose.msra.mxu0 0.0
    %1193 = vmatpush.xpose.msra.mxu0 0.0
    %1194 = vmatpush.xpose.msra.mxu0 0.0
    %1195 = vmatpush.xpose.msra.mxu0 0.0
    %1196 = vmatpush.xpose.msra.mxu0 0.0
    %1197 = vmatpush.xpose.msra.mxu0 0.0
    %1198 = vmatpush.xpose.msra.mxu0 0.0
    %1199 = vmatpush.xpose.msra.mxu0 0.0
    %1200 = vmatpush.xpose.msra.mxu0 0.0
    %1201 = vmatpush.xpose.msra.mxu0 0.0
    %1202 = vmatpush.xpose.msra.mxu0 %v1185
    %1203 = vmatmul.f32.gmra.mxu0 %v1183
    %v1204 = vpop.f32.mrf.mxu0
    %v1205 = vadd.f32 0.0, %v1204
    %1206 = vdwg.mxu0
    %1207 = vrot.lane.b32.xlu0 %v1072, 120
    %v1208 = vpop.permute.xlu0 %1207
    %v1209 = vsel %vm142, %v1072, 0
    %v1211 = vsel %vm142, %v1208, 0
    %1213 = vmatpush.xpose.msra.mxu0 0.0
    %1214 = vmatpush.xpose.msra.mxu0 0.0
    %1215 = vmatpush.xpose.msra.mxu0 0.0
    %1216 = vmatpush.xpose.msra.mxu0 0.0
    %1217 = vmatpush.xpose.msra.mxu0 0.0
    %1218 = vmatpush.xpose.msra.mxu0 0.0
    %1219 = vmatpush.xpose.msra.mxu0 0.0
    %1220 = vmatpush.xpose.msra.mxu0 0.0
    %1221 = vmatpush.xpose.msra.mxu0 0.0
    %1222 = vmatpush.xpose.msra.mxu0 0.0
    %1223 = vmatpush.xpose.msra.mxu0 0.0
    %1224 = vmatpush.xpose.msra.mxu0 0.0
    %1225 = vmatpush.xpose.msra.mxu0 0.0
    %1226 = vmatpush.xpose.msra.mxu0 0.0
    %1227 = vmatpush.xpose.msra.mxu0 0.0
    %1228 = vmatpush.xpose.msra.mxu0 %v1211
    %1229 = vmatmul.f32.gmra.mxu0 %v1209
    %v1230 = vpop.f32.mrf.mxu0
    %v1231 = vadd.f32 0.0, %v1230
    %1232 = vdwg.mxu0
    %1233 = vrot.lane.b32.xlu0 %v1074, 120
    %v1234 = vpop.permute.xlu0 %1233
    %v1235 = vsel %vm142, %v1074, 0
    %v1237 = vsel %vm142, %v1234, 0
    %1239 = vmatpush.xpose.msra.mxu0 0.0
    %1240 = vmatpush.xpose.msra.mxu0 0.0
    %1241 = vmatpush.xpose.msra.mxu0 0.0
    %1242 = vmatpush.xpose.msra.mxu0 0.0
    %1243 = vmatpush.xpose.msra.mxu0 0.0
    %1244 = vmatpush.xpose.msra.mxu0 0.0
    %1245 = vmatpush.xpose.msra.mxu0 0.0
    %1246 = vmatpush.xpose.msra.mxu0 0.0
    %1247 = vmatpush.xpose.msra.mxu0 0.0
    %1248 = vmatpush.xpose.msra.mxu0 0.0
    %1249 = vmatpush.xpose.msra.mxu0 0.0
    %1250 = vmatpush.xpose.msra.mxu0 0.0
    %1251 = vmatpush.xpose.msra.mxu0 0.0
    %1252 = vmatpush.xpose.msra.mxu0 0.0
    %1253 = vmatpush.xpose.msra.mxu0 0.0
    %1254 = vmatpush.xpose.msra.mxu0 %v1237
    %1255 = vmatmul.f32.gmra.mxu0 %v1235
    %v1256 = vpop.f32.mrf.mxu0
    %v1257 = vadd.f32 0.0, %v1256
    %1258 = vdwg.mxu0
    %1259 = vrot.lane.b32.xlu0 %v1076, 120
    %v1260 = vpop.permute.xlu0 %1259
    %v1261 = vsel %vm142, %v1076, 0
    %v1263 = vsel %vm142, %v1260, 0
    %1265 = vmatpush.xpose.msra.mxu0 0.0
    %1266 = vmatpush.xpose.msra.mxu0 0.0
    %1267 = vmatpush.xpose.msra.mxu0 0.0
    %1268 = vmatpush.xpose.msra.mxu0 0.0
    %1269 = vmatpush.xpose.msra.mxu0 0.0
    %1270 = vmatpush.xpose.msra.mxu0 0.0
    %1271 = vmatpush.xpose.msra.mxu0 0.0
    %1272 = vmatpush.xpose.msra.mxu0 0.0
    %1273 = vmatpush.xpose.msra.mxu0 0.0
    %1274 = vmatpush.xpose.msra.mxu0 0.0
    %1275 = vmatpush.xpose.msra.mxu0 0.0
    %1276 = vmatpush.xpose.msra.mxu0 0.0
    %1277 = vmatpush.xpose.msra.mxu0 0.0
    %1278 = vmatpush.xpose.msra.mxu0 0.0
    %1279 = vmatpush.xpose.msra.mxu0 0.0
    %1280 = vmatpush.xpose.msra.mxu0 %v1263
    %1281 = vmatmul.f32.gmra.mxu0 %v1261
    %v1282 = vpop.f32.mrf.mxu0
    %v1283 = vadd.f32 0.0, %v1282
    %1284 = vdwg.mxu0
    %v1285 = vmul.f32 %v1101, 0.35355338
    %v1286 = vmul.f32 %v1127, 0.35355338
    %v1287 = vmul.f32 %v1153, 0.35355338
    %v1288 = vmul.f32 %v1179, 0.35355338
    %v1289 = vmul.f32 %v1205, 0.35355338
    %v1290 = vmul.f32 %v1231, 0.35355338
    %v1291 = vmul.f32 %v1257, 0.35355338
    %v1292 = vmul.f32 %v1283, 0.35355338
    %v1293 = vsel %vm142, %v1285, -inf
    %1294 = vmax.xlane.f32.xlu0 %v1293
    %v1295 = vpop.xlane.xlu0 %1294
    %v1296 = vsel %vm142, %v1286, -inf
    %1297 = vmax.xlane.f32.xlu0 %v1296
    %v1298 = vpop.xlane.xlu0 %1297
    %v1299 = vsel %vm142, %v1287, -inf
    %1300 = vmax.xlane.f32.xlu0 %v1299
    %v1301 = vpop.xlane.xlu0 %1300
    %v1302 = vsel %vm142, %v1288, -inf
    %1303 = vmax.xlane.f32.xlu0 %v1302
    %v1304 = vpop.xlane.xlu0 %1303
    %v1305 = vsel %vm142, %v1289, -inf
    %1306 = vmax.xlane.f32.xlu0 %v1305
    %v1307 = vpop.xlane.xlu0 %1306
    %v1308 = vsel %vm142, %v1290, -inf
    %1309 = vmax.xlane.f32.xlu0 %v1308
    %v1310 = vpop.xlane.xlu0 %1309
    %v1311 = vsel %vm142, %v1291, -inf
    %1312 = vmax.xlane.f32.xlu0 %v1311
    %v1313 = vpop.xlane.xlu0 %1312
    %v1314 = vsel %vm142, %v1292, -inf
    %1315 = vmax.xlane.f32.xlu0 %v1314
    %v1316 = vpop.xlane.xlu0 %1315
    %v1317 = vsub.f32 %v1285, %v1295
    %v1318 = vsub.f32 %v1286, %v1298
    %v1319 = vsub.f32 %v1287, %v1301
    %v1320 = vsub.f32 %v1288, %v1304
    %v1321 = vsub.f32 %v1289, %v1307
    %v1322 = vsub.f32 %v1290, %v1310
    %v1323 = vsub.f32 %v1291, %v1313
    %v1324 = vsub.f32 %v1292, %v1316
    %v1325 = vmul.f32 %v1317, 1.442695
    %v1326 = vpow.pop %v1325
    %v1327 = vmul.f32 %v1318, 1.442695
    %v1328 = vpow.pop %v1327
    %v1329 = vmul.f32 %v1319, 1.442695
    %v1330 = vpow.pop %v1329
    %v1331 = vmul.f32 %v1320, 1.442695
    %v1332 = vpow.pop %v1331
    %v1333 = vmul.f32 %v1321, 1.442695
    %v1334 = vpow.pop %v1333
    %v1335 = vmul.f32 %v1322, 1.442695
    %v1336 = vpow.pop %v1335
    %v1337 = vmul.f32 %v1323, 1.442695
    %v1338 = vpow.pop %v1337
    %v1339 = vmul.f32 %v1324, 1.442695
    %v1340 = vpow.pop %v1339
    %v1341 = vsel %vm142, %v1326, 0.0
    %1342 = vadd.xlane.f32.xlu0 %v1341
    %v1343 = vpop.xlane.xlu0 %1342
    %v1344 = vsel %vm142, %v1328, 0.0
    %1345 = vadd.xlane.f32.xlu0 %v1344
    %v1346 = vpop.xlane.xlu0 %1345
    %v1347 = vsel %vm142, %v1330, 0.0
    %1348 = vadd.xlane.f32.xlu0 %v1347
    %v1349 = vpop.xlane.xlu0 %1348
    %v1350 = vsel %vm142, %v1332, 0.0
    %1351 = vadd.xlane.f32.xlu0 %v1350
    %v1352 = vpop.xlane.xlu0 %1351
    %v1353 = vsel %vm142, %v1334, 0.0
    %1354 = vadd.xlane.f32.xlu0 %v1353
    %v1355 = vpop.xlane.xlu0 %1354
    %v1356 = vsel %vm142, %v1336, 0.0
    %1357 = vadd.xlane.f32.xlu0 %v1356
    %v1358 = vpop.xlane.xlu0 %1357
    %v1359 = vsel %vm142, %v1338, 0.0
    %1360 = vadd.xlane.f32.xlu0 %v1359
    %v1361 = vpop.xlane.xlu0 %1360
    %v1362 = vsel %vm142, %v1340, 0.0
    %1363 = vadd.xlane.f32.xlu0 %v1362
    %v1364 = vpop.xlane.xlu0 %1363
    %v1365 = vrcp.pop %v1343
    %v1366 = vmul.f32 %v1343, %v1365
    %v1367 = vsub.f32 1.0, %v1366
    %v1368 = vmul.f32 %v1365, %v1367
    %v1369 = vadd.f32 %v1365, %v1368
    %vm1370 = vweird.f32 %v1343
    %vm1371 = vweird.f32 %v1365
    %vm1372 = vmor %vm1370, %vm1371
    %v1373 = vsel %vm1372, %v1365, %v1369
    %v1374 = vand.u32 2147483647, %v1343
    %vm1375 = vcmp.eq.f32.partialorder %v1374, 8.507059e+37
    %v1376 = vand.u32 %v1343, 2147483648
    %v1377 = vor.u32 1.1754944e-38, %v1376
    %v1378 = vsel %vm1375, %v1377, %v1373
    %v1379 = vmul.f32 %v1326, %v1378
    %v1380 = vrcp.pop %v1346
    %v1381 = vmul.f32 %v1346, %v1380
    %v1382 = vsub.f32 1.0, %v1381
    %v1383 = vmul.f32 %v1380, %v1382
    %v1384 = vadd.f32 %v1380, %v1383
    %vm1385 = vweird.f32 %v1346
    %vm1386 = vweird.f32 %v1380
    %vm1387 = vmor %vm1385, %vm1386
    %v1388 = vsel %vm1387, %v1380, %v1384
    %v1389 = vand.u32 2147483647, %v1346
    %vm1390 = vcmp.eq.f32.partialorder %v1389, 8.507059e+37
    %v1391 = vand.u32 %v1346, 2147483648
    %v1392 = vor.u32 1.1754944e-38, %v1391
    %v1393 = vsel %vm1390, %v1392, %v1388
    %v1394 = vmul.f32 %v1328, %v1393
    %v1395 = vrcp.pop %v1349
    %v1396 = vmul.f32 %v1349, %v1395
    %v1397 = vsub.f32 1.0, %v1396
    %v1398 = vmul.f32 %v1395, %v1397
    %v1399 = vadd.f32 %v1395, %v1398
    %vm1400 = vweird.f32 %v1349
    %vm1401 = vweird.f32 %v1395
    %vm1402 = vmor %vm1400, %vm1401
    %v1403 = vsel %vm1402, %v1395, %v1399
    %v1404 = vand.u32 2147483647, %v1349
    %vm1405 = vcmp.eq.f32.partialorder %v1404, 8.507059e+37
    %v1406 = vand.u32 %v1349, 2147483648
    %v1407 = vor.u32 1.1754944e-38, %v1406
    %v1408 = vsel %vm1405, %v1407, %v1403
    %v1409 = vmul.f32 %v1330, %v1408
    %v1410 = vrcp.pop %v1352
    %v1411 = vmul.f32 %v1352, %v1410
    %v1412 = vsub.f32 1.0, %v1411
    %v1413 = vmul.f32 %v1410, %v1412
    %v1414 = vadd.f32 %v1410, %v1413
    %vm1415 = vweird.f32 %v1352
    %vm1416 = vweird.f32 %v1410
    %vm1417 = vmor %vm1415, %vm1416
    %v1418 = vsel %vm1417, %v1410, %v1414
    %v1419 = vand.u32 2147483647, %v1352
    %vm1420 = vcmp.eq.f32.partialorder %v1419, 8.507059e+37
    %v1421 = vand.u32 %v1352, 2147483648
    %v1422 = vor.u32 1.1754944e-38, %v1421
    %v1423 = vsel %vm1420, %v1422, %v1418
    %v1424 = vmul.f32 %v1332, %v1423
    %v1425 = vrcp.pop %v1355
    %v1426 = vmul.f32 %v1355, %v1425
    %v1427 = vsub.f32 1.0, %v1426
    %v1428 = vmul.f32 %v1425, %v1427
    %v1429 = vadd.f32 %v1425, %v1428
    %vm1430 = vweird.f32 %v1355
    %vm1431 = vweird.f32 %v1425
    %vm1432 = vmor %vm1430, %vm1431
    %v1433 = vsel %vm1432, %v1425, %v1429
    %v1434 = vand.u32 2147483647, %v1355
    %vm1435 = vcmp.eq.f32.partialorder %v1434, 8.507059e+37
    %v1436 = vand.u32 %v1355, 2147483648
    %v1437 = vor.u32 1.1754944e-38, %v1436
    %v1438 = vsel %vm1435, %v1437, %v1433
    %v1439 = vmul.f32 %v1334, %v1438
    %v1440 = vrcp.pop %v1358
    %v1441 = vmul.f32 %v1358, %v1440
    %v1442 = vsub.f32 1.0, %v1441
    %v1443 = vmul.f32 %v1440, %v1442
    %v1444 = vadd.f32 %v1440, %v1443
    %vm1445 = vweird.f32 %v1358
    %vm1446 = vweird.f32 %v1440
    %vm1447 = vmor %vm1445, %vm1446
    %v1448 = vsel %vm1447, %v1440, %v1444
    %v1449 = vand.u32 2147483647, %v1358
    %vm1450 = vcmp.eq.f32.partialorder %v1449, 8.507059e+37
    %v1451 = vand.u32 %v1358, 2147483648
    %v1452 = vor.u32 1.1754944e-38, %v1451
    %v1453 = vsel %vm1450, %v1452, %v1448
    %v1454 = vmul.f32 %v1336, %v1453
    %v1455 = vrcp.pop %v1361
    %v1456 = vmul.f32 %v1361, %v1455
    %v1457 = vsub.f32 1.0, %v1456
    %v1458 = vmul.f32 %v1455, %v1457
    %v1459 = vadd.f32 %v1455, %v1458
    %vm1460 = vweird.f32 %v1361
    %vm1461 = vweird.f32 %v1455
    %vm1462 = vmor %vm1460, %vm1461
    %v1463 = vsel %vm1462, %v1455, %v1459
    %v1464 = vand.u32 2147483647, %v1361
    %vm1465 = vcmp.eq.f32.partialorder %v1464, 8.507059e+37
    %v1466 = vand.u32 %v1361, 2147483648
    %v1467 = vor.u32 1.1754944e-38, %v1466
    %v1468 = vsel %vm1465, %v1467, %v1463
    %v1469 = vmul.f32 %v1338, %v1468
    %v1470 = vrcp.pop %v1364
    %v1471 = vmul.f32 %v1364, %v1470
    %v1472 = vsub.f32 1.0, %v1471
    %v1473 = vmul.f32 %v1470, %v1472
    %v1474 = vadd.f32 %v1470, %v1473
    %vm1475 = vweird.f32 %v1364
    %vm1476 = vweird.f32 %v1470
    %vm1477 = vmor %vm1475, %vm1476
    %v1478 = vsel %vm1477, %v1470, %v1474
    %v1479 = vand.u32 2147483647, %v1364
    %vm1480 = vcmp.eq.f32.partialorder %v1479, 8.507059e+37
    %v1481 = vand.u32 %v1364, 2147483648
    %v1482 = vor.u32 1.1754944e-38, %v1481
    %v1483 = vsel %vm1480, %v1482, %v1478
    %v1484 = vmul.f32 %v1340, %v1483
    %1485 = vrot.lane.b32.xlu0 %v1058, 112
    %v1486 = vpop.permute.xlu0 %1485
    %v1489 = vsel %vm142, %v1379, 0
    %1491 = vmatpush.msra.mxu0 0.0
    %1492 = vmatpush.msra.mxu0 0.0
    %1493 = vmatpush.msra.mxu0 0.0
    %1494 = vmatpush.msra.mxu0 0.0
    %1495 = vmatpush.msra.mxu0 0.0
    %1496 = vmatpush.msra.mxu0 0.0
    %1497 = vmatpush.msra.mxu0 0.0
    %1498 = vmatpush.msra.mxu0 0.0
    %1499 = vmatpush.msra.mxu0 0.0
    %1500 = vmatpush.msra.mxu0 0.0
    %1501 = vmatpush.msra.mxu0 0.0
    %1502 = vmatpush.msra.mxu0 0.0
    %1503 = vmatpush.msra.mxu0 0.0
    %1504 = vmatpush.msra.mxu0 0.0
    %1505 = vmatpush.msra.mxu0 0.0
    %1506 = vmatpush.msra.mxu0 %v1486
    %1507 = vmatmul.f32.gmra.mxu0 %v1489
    %v1508 = vpop.f32.mrf.mxu0
    %v1509 = vadd.f32 0.0, %v1508
    %1510 = vdwg.mxu0
    %1511 = vrot.lane.b32.xlu0 %v1061, 112
    %v1512 = vpop.permute.xlu0 %1511
    %v1515 = vsel %vm142, %v1394, 0
    %1517 = vmatpush.msra.mxu0 0.0
    %1518 = vmatpush.msra.mxu0 0.0
    %1519 = vmatpush.msra.mxu0 0.0
    %1520 = vmatpush.msra.mxu0 0.0
    %1521 = vmatpush.msra.mxu0 0.0
    %1522 = vmatpush.msra.mxu0 0.0
    %1523 = vmatpush.msra.mxu0 0.0
    %1524 = vmatpush.msra.mxu0 0.0
    %1525 = vmatpush.msra.mxu0 0.0
    %1526 = vmatpush.msra.mxu0 0.0
    %1527 = vmatpush.msra.mxu0 0.0
    %1528 = vmatpush.msra.mxu0 0.0
    %1529 = vmatpush.msra.mxu0 0.0
    %1530 = vmatpush.msra.mxu0 0.0
    %1531 = vmatpush.msra.mxu0 0.0
    %1532 = vmatpush.msra.mxu0 %v1512
    %1533 = vmatmul.f32.gmra.mxu0 %v1515
    %v1534 = vpop.f32.mrf.mxu0
    %v1535 = vadd.f32 0.0, %v1534
    %1536 = vdwg.mxu0
    %1537 = vrot.lane.b32.xlu0 %v1066, 112
    %v1538 = vpop.permute.xlu0 %1537
    %v1541 = vsel %vm142, %v1409, 0
    %1543 = vmatpush.msra.mxu0 0.0
    %1544 = vmatpush.msra.mxu0 0.0
    %1545 = vmatpush.msra.mxu0 0.0
    %1546 = vmatpush.msra.mxu0 0.0
    %1547 = vmatpush.msra.mxu0 0.0
    %1548 = vmatpush.msra.mxu0 0.0
    %1549 = vmatpush.msra.mxu0 0.0
    %1550 = vmatpush.msra.mxu0 0.0
    %1551 = vmatpush.msra.mxu0 0.0
    %1552 = vmatpush.msra.mxu0 0.0
    %1553 = vmatpush.msra.mxu0 0.0
    %1554 = vmatpush.msra.mxu0 0.0
    %1555 = vmatpush.msra.mxu0 0.0
    %1556 = vmatpush.msra.mxu0 0.0
    %1557 = vmatpush.msra.mxu0 0.0
    %1558 = vmatpush.msra.mxu0 %v1538
    %1559 = vmatmul.f32.gmra.mxu0 %v1541
    %v1560 = vpop.f32.mrf.mxu0
    %v1561 = vadd.f32 0.0, %v1560
    %1562 = vdwg.mxu0
    %1563 = vrot.lane.b32.xlu0 %v1068, 112
    %v1564 = vpop.permute.xlu0 %1563
    %v1567 = vsel %vm142, %v1424, 0
    %1569 = vmatpush.msra.mxu0 0.0
    %1570 = vmatpush.msra.mxu0 0.0
    %1571 = vmatpush.msra.mxu0 0.0
    %1572 = vmatpush.msra.mxu0 0.0
    %1573 = vmatpush.msra.mxu0 0.0
    %1574 = vmatpush.msra.mxu0 0.0
    %1575 = vmatpush.msra.mxu0 0.0
    %1576 = vmatpush.msra.mxu0 0.0
    %1577 = vmatpush.msra.mxu0 0.0
    %1578 = vmatpush.msra.mxu0 0.0
    %1579 = vmatpush.msra.mxu0 0.0
    %1580 = vmatpush.msra.mxu0 0.0
    %1581 = vmatpush.msra.mxu0 0.0
    %1582 = vmatpush.msra.mxu0 0.0
    %1583 = vmatpush.msra.mxu0 0.0
    %1584 = vmatpush.msra.mxu0 %v1564
    %1585 = vmatmul.f32.gmra.mxu0 %v1567
    %v1586 = vpop.f32.mrf.mxu0
    %v1587 = vadd.f32 0.0, %v1586
    %1588 = vdwg.mxu0
    %1589 = vrot.lane.b32.xlu0 %v1070, 112
    %v1590 = vpop.permute.xlu0 %1589
    %v1593 = vsel %vm142, %v1439, 0
    %1595 = vmatpush.msra.mxu0 0.0
    %1596 = vmatpush.msra.mxu0 0.0
    %1597 = vmatpush.msra.mxu0 0.0
    %1598 = vmatpush.msra.mxu0 0.0
    %1599 = vmatpush.msra.mxu0 0.0
    %1600 = vmatpush.msra.mxu0 0.0
    %1601 = vmatpush.msra.mxu0 0.0
    %1602 = vmatpush.msra.mxu0 0.0
    %1603 = vmatpush.msra.mxu0 0.0
    %1604 = vmatpush.msra.mxu0 0.0
    %1605 = vmatpush.msra.mxu0 0.0
    %1606 = vmatpush.msra.mxu0 0.0
    %1607 = vmatpush.msra.mxu0 0.0
    %1608 = vmatpush.msra.mxu0 0.0
    %1609 = vmatpush.msra.mxu0 0.0
    %1610 = vmatpush.msra.mxu0 %v1590
    %1611 = vmatmul.f32.gmra.mxu0 %v1593
    %v1612 = vpop.f32.mrf.mxu0
    %v1613 = vadd.f32 0.0, %v1612
    %1614 = vdwg.mxu0
    %1615 = vrot.lane.b32.xlu0 %v1072, 112
    %v1616 = vpop.permute.xlu0 %1615
    %v1619 = vsel %vm142, %v1454, 0
    %1621 = vmatpush.msra.mxu0 0.0
    %1622 = vmatpush.msra.mxu0 0.0
    %1623 = vmatpush.msra.mxu0 0.0
    %1624 = vmatpush.msra.mxu0 0.0
    %1625 = vmatpush.msra.mxu0 0.0
    %1626 = vmatpush.msra.mxu0 0.0
    %1627 = vmatpush.msra.mxu0 0.0
    %1628 = vmatpush.msra.mxu0 0.0
    %1629 = vmatpush.msra.mxu0 0.0
    %1630 = vmatpush.msra.mxu0 0.0
    %1631 = vmatpush.msra.mxu0 0.0
    %1632 = vmatpush.msra.mxu0 0.0
    %1633 = vmatpush.msra.mxu0 0.0
    %1634 = vmatpush.msra.mxu0 0.0
    %1635 = vmatpush.msra.mxu0 0.0
    %1636 = vmatpush.msra.mxu0 %v1616
    %1637 = vmatmul.f32.gmra.mxu0 %v1619
    %v1638 = vpop.f32.mrf.mxu0
    %v1639 = vadd.f32 0.0, %v1638
    %1640 = vdwg.mxu0
    %1641 = vrot.lane.b32.xlu0 %v1074, 112
    %v1642 = vpop.permute.xlu0 %1641
    %v1645 = vsel %vm142, %v1469, 0
    %1647 = vmatpush.msra.mxu0 0.0
    %1648 = vmatpush.msra.mxu0 0.0
    %1649 = vmatpush.msra.mxu0 0.0
    %1650 = vmatpush.msra.mxu0 0.0
    %1651 = vmatpush.msra.mxu0 0.0
    %1652 = vmatpush.msra.mxu0 0.0
    %1653 = vmatpush.msra.mxu0 0.0
    %1654 = vmatpush.msra.mxu0 0.0
    %1655 = vmatpush.msra.mxu0 0.0
    %1656 = vmatpush.msra.mxu0 0.0
    %1657 = vmatpush.msra.mxu0 0.0
    %1658 = vmatpush.msra.mxu0 0.0
    %1659 = vmatpush.msra.mxu0 0.0
    %1660 = vmatpush.msra.mxu0 0.0
    %1661 = vmatpush.msra.mxu0 0.0
    %1662 = vmatpush.msra.mxu0 %v1642
    %1663 = vmatmul.f32.gmra.mxu0 %v1645
    %v1664 = vpop.f32.mrf.mxu0
    %v1665 = vadd.f32 0.0, %v1664
    %1666 = vdwg.mxu0
    %1667 = vrot.lane.b32.xlu0 %v1076, 112
    %v1668 = vpop.permute.xlu0 %1667
    %v1671 = vsel %vm142, %v1484, 0
    %1673 = vmatpush.msra.mxu0 0.0
    %1674 = vmatpush.msra.mxu0 0.0
    %1675 = vmatpush.msra.mxu0 0.0
    %1676 = vmatpush.msra.mxu0 0.0
    %1677 = vmatpush.msra.mxu0 0.0
    %1678 = vmatpush.msra.mxu0 0.0
    %1679 = vmatpush.msra.mxu0 0.0
    %1680 = vmatpush.msra.mxu0 0.0
    %1681 = vmatpush.msra.mxu0 0.0
    %1682 = vmatpush.msra.mxu0 0.0
    %1683 = vmatpush.msra.mxu0 0.0
    %1684 = vmatpush.msra.mxu0 0.0
    %1685 = vmatpush.msra.mxu0 0.0
    %1686 = vmatpush.msra.mxu0 0.0
    %1687 = vmatpush.msra.mxu0 0.0
    %1688 = vmatpush.msra.mxu0 %v1668
    %1689 = vmatmul.f32.gmra.mxu0 %v1671
    %v1690 = vpop.f32.mrf.mxu0
    %v1691 = vadd.f32 0.0, %v1690
    %1692 = vdwg.mxu0
    %1695 = vrot.lane.b32.xlu0 %v1561, 8
    %v1696 = vpop.permute.xlu0 %1695
    %1697 = vrot.lane.b32.xlu0 %v1587, 8
    %v1698 = vpop.permute.xlu0 %1697
    %1703 = vrot.lane.b32.xlu0 %v1613, 16
    %v1704 = vpop.permute.xlu0 %1703
    %1705 = vrot.lane.b32.xlu0 %v1639, 16
    %v1706 = vpop.permute.xlu0 %1705
    %1711 = vrot.lane.b32.xlu0 %v1665, 24
    %v1712 = vpop.permute.xlu0 %1711
    %1713 = vrot.lane.b32.xlu0 %v1691, 24
    %v1714 = vpop.permute.xlu0 %1713
    %v1717 = vsel %vm142, %v1509, %v1696
    %v1718 = vsel %vm142, %v1535, %v1698
    %v1719 = vsel %vm783, %v1717, %v1704
    %v1720 = vsel %vm783, %v1718, %v1706
    %v1721 = vsel %vm786, %v1719, %v1712
    %v1722 = vsel %vm786, %v1720, %v1714
    %1723 = vrot.lane.b32.xlu0 %v1024, 64
    %v1724 = vpop.permute.xlu0 %1723
    %v1727 = vsel %vm35, %v1721, 0
    %v1730 = vsel %vm35, %v1722, 0
    %1732 = vmatpush.msra.mxu0 0.0
    %1733 = vmatpush.msra.mxu0 0.0
    %1734 = vmatpush.msra.mxu0 0.0
    %1735 = vmatpush.msra.mxu0 0.0
    %1736 = vmatpush.msra.mxu0 0.0
    %1737 = vmatpush.msra.mxu0 0.0
    %1738 = vmatpush.msra.mxu0 0.0
    %1739 = vmatpush.msra.mxu0 0.0
    %1740 = vmatpush.msra.mxu0 0.0
    %1741 = vmatpush.msra.mxu0 0.0
    %1742 = vmatpush.msra.mxu0 0.0
    %1743 = vmatpush.msra.mxu0 0.0
    %1744 = vmatpush.msra.mxu0 %v966
    %1745 = vmatpush.msra.mxu0 %v965
    %1746 = vmatpush.msra.mxu0 %v964
    %1747 = vmatpush.msra.mxu0 %v963
    %1748 = vmatmul.f32.gmra.mxu0 %v1727
    %v1749 = vpop.f32.mrf.mxu0
    %v1750 = vadd.f32 %v1724, %v1749
    %1751 = vmatmul.f32.gmra.mxu0 %v1730
    %v1752 = vpop.f32.mrf.mxu0
    %v1753 = vadd.f32 %v1724, %v1752
    %1754 = vdwg.mxu0
    %v1755 = vadd.f32 %v1750, %v957
    %v1756 = vadd.f32 %v1753, %v958
    %v1757 = vsel %vm35, %v1755, 0.0
    %1758 = vadd.xlane.f32.xlu0 %v1757
    %v1759 = vpop.xlane.xlu0 %1758
    %v1760 = vsel %vm35, %v1756, 0.0
    %1761 = vadd.xlane.f32.xlu0 %v1760
    %v1762 = vpop.xlane.xlu0 %1761
    %v1763 = vmul.f32 %v1759, %v48
    %v1764 = vmul.f32 %v1762, %v48
    %v1765 = vsub.f32 %v1755, %v1763
    %v1766 = vsub.f32 %v1756, %v1764
    %v1767 = vmul.f32 %v1765, %v1765
    %v1768 = vmul.f32 %v1766, %v1766
    %v1769 = vsel %vm35, %v1767, 0.0
    %1770 = vadd.xlane.f32.xlu0 %v1769
    %v1771 = vpop.xlane.xlu0 %1770
    %v1772 = vsel %vm35, %v1768, 0.0
    %1773 = vadd.xlane.f32.xlu0 %v1772
    %v1774 = vpop.xlane.xlu0 %1773
    %v1775 = vmul.f32 %v1771, %v48
    %v1776 = vmul.f32 %v1774, %v48
    %v1777 = vadd.f32 %v1775, 1e-06
    %v1778 = vadd.f32 %v1776, 1e-06
    %v1779 = vrsqrt.pop %v1777
    %v1780 = vmul.f32 %v1779, %v1777
    %v1781 = vmul.f32 %v1780, %v1779
    %v1782 = vmul.f32 0.5, %v1781
    %v1783 = vsub.f32 1.5, %v1782
    %v1784 = vmul.f32 %v1779, %v1783
    %vm1785 = vweird.f32 %v1777
    %vm1786 = vweird.f32 %v1779
    %vm1787 = vmor %vm1785, %vm1786
    %v1788 = vsel %vm1787, %v1779, %v1784
    %v1789 = vrsqrt.pop %v1778
    %v1790 = vmul.f32 %v1789, %v1778
    %v1791 = vmul.f32 %v1790, %v1789
    %v1792 = vmul.f32 0.5, %v1791
    %v1793 = vsub.f32 1.5, %v1792
    %v1794 = vmul.f32 %v1789, %v1793
    %vm1795 = vweird.f32 %v1778
    %vm1796 = vweird.f32 %v1789
    %vm1797 = vmor %vm1795, %vm1796
    %v1798 = vsel %vm1797, %v1789, %v1794
    %v1799 = vmul.f32 %v1765, %v1788
    %v1800 = vmul.f32 %v1766, %v1798
    %v1801 = vperm.slane %v979, 2
    %v1802 = vmul.f32 %v1799, %v1801
    %v1803 = vmul.f32 %v1800, %v1801
    %1805 = vrot.lane.b32.xlu0 %v1801, 96
    %v1806 = vpop.permute.xlu0 %1805
    %v1808 = vadd.f32 %v1802, %v1806
    %v1809 = vadd.f32 %v1803, %v1806
    %v1810 = vperm.slane %v979, 3
    %v1812 = vsel %vm35, %v1808, 0
    %v1815 = vsel %vm35, %v1809, 0
    %1817 = vmatpush.msra.mxu0 0.0
    %1818 = vmatpush.msra.mxu0 0.0
    %1819 = vmatpush.msra.mxu0 0.0
    %1820 = vmatpush.msra.mxu0 0.0
    %1821 = vmatpush.msra.mxu0 0.0
    %1822 = vmatpush.msra.mxu0 0.0
    %1823 = vmatpush.msra.mxu0 0.0
    %1824 = vmatpush.msra.mxu0 0.0
    %1825 = vmatpush.msra.mxu0 0.0
    %1826 = vmatpush.msra.mxu0 0.0
    %1827 = vmatpush.msra.mxu0 0.0
    %1828 = vmatpush.msra.mxu0 0.0
    %1829 = vmatpush.msra.mxu0 %v970
    %1830 = vmatpush.msra.mxu0 %v969
    %1831 = vmatpush.msra.mxu0 %v968
    %1832 = vmatpush.msra.mxu0 %v967
    %1833 = vmatmul.f32.gmra.mxu0 %v1812
    %v1834 = vpop.f32.mrf.mxu0
    %v1835 = vadd.f32 %v1810, %v1834
    %1836 = vmatmul.f32.gmra.mxu0 %v1815
    %v1837 = vpop.f32.mrf.mxu0
    %v1838 = vadd.f32 %v1810, %v1837
    %1839 = vdwg.mxu0
    %v1840 = vmul.f32 %v1835, 0.5
    %v1841 = vmul.f32 %v1838, 0.5
    %v1842 = vmul.f32 %v1835, 0.044715
    %v1843 = vmul.f32 %v1838, 0.044715
    %v1844 = vmul.f32 %v1842, %v1835
    %v1845 = vmul.f32 %v1843, %v1838
    %v1846 = vmul.f32 %v1844, %v1835
    %v1847 = vmul.f32 %v1845, %v1838
    %v1848 = vadd.f32 %v1835, %v1846
    %v1849 = vadd.f32 %v1838, %v1847
    %v1850 = vmul.f32 %v1848, 0.7978846
    %v1851 = vmul.f32 %v1849, 0.7978846
    %v1852 = vtanh.pop %v1850
    %v1853 = vtanh.pop %v1851
    %v1854 = vadd.f32 %v1852, 1.0
    %v1855 = vadd.f32 %v1853, 1.0
    %v1856 = vmul.f32 %v1840, %v1854
    %v1857 = vmul.f32 %v1841, %v1855
    %1858 = vrot.lane.b32.xlu0 %v1801, 64
    %v1859 = vpop.permute.xlu0 %1858
    %v1862 = vsel %vm927, %v1856, 0
    %v1865 = vsel %vm927, %v1857, 0
    %1867 = vmatpush.msra.mxu0 0.0
    %1868 = vmatpush.msra.mxu0 0.0
    %1869 = vmatpush.msra.mxu0 0.0
    %1870 = vmatpush.msra.mxu0 0.0
    %1871 = vmatpush.msra.mxu0 0.0
    %1872 = vmatpush.msra.mxu0 0.0
    %1873 = vmatpush.msra.mxu0 0.0
    %1874 = vmatpush.msra.mxu0 0.0
    %1875 = vmatpush.msra.mxu0 %v978
    %1876 = vmatpush.msra.mxu0 %v977
    %1877 = vmatpush.msra.mxu0 %v976
    %1878 = vmatpush.msra.mxu0 %v975
    %1879 = vmatpush.msra.mxu0 %v974
    %1880 = vmatpush.msra.mxu0 %v973
    %1881 = vmatpush.msra.mxu0 %v972
    %1882 = vmatpush.msra.mxu0 %v971
    %1883 = vmatmul.f32.gmra.mxu0 %v1862
    %v1884 = vpop.f32.mrf.mxu0
    %v1885 = vadd.f32 %v1859, %v1884
    %1886 = vmatmul.f32.gmra.mxu0 %v1865
    %v1887 = vpop.f32.mrf.mxu0
    %v1888 = vadd.f32 %v1859, %v1887
    %1889 = vdwg.mxu0
    %v1890 = vadd.f32 %v1885, %v1755
    %v1891 = vadd.f32 %v1888, %v1756
    %v1892 = vld [vmem:[%s1 + $0x150] sm:$0x1]
    %v1893 = vsel %vm35, %v1890, 0.0
    %1894 = vadd.xlane.f32.xlu0 %v1893
    %v1895 = vpop.xlane.xlu0 %1894
    %v1896 = vsel %vm35, %v1891, 0.0
    %1897 = vadd.xlane.f32.xlu0 %v1896
    %v1898 = vpop.xlane.xlu0 %1897
    %v1899 = vmul.f32 %v1895, %v48
    %v1900 = vmul.f32 %v1898, %v48
    %v1901 = vsub.f32 %v1890, %v1899
    %v1902 = vsub.f32 %v1891, %v1900
    %v1903 = vmul.f32 %v1901, %v1901
    %v1904 = vmul.f32 %v1902, %v1902
    %v1905 = vsel %vm35, %v1903, 0.0
    %1906 = vadd.xlane.f32.xlu0 %v1905
    %v1907 = vpop.xlane.xlu0 %1906
    %v1908 = vsel %vm35, %v1904, 0.0
    %1909 = vadd.xlane.f32.xlu0 %v1908
    %v1910 = vpop.xlane.xlu0 %1909
    %v1911 = vmul.f32 %v1907, %v48
    %v1912 = vmul.f32 %v1910, %v48
    %v1913 = vadd.f32 %v1911, 1e-06
    %v1914 = vadd.f32 %v1912, 1e-06
    %v1915 = vrsqrt.pop %v1913
    %v1916 = vmul.f32 %v1915, %v1913
    %v1917 = vmul.f32 %v1916, %v1915
    %v1918 = vmul.f32 0.5, %v1917
    %v1919 = vsub.f32 1.5, %v1918
    %v1920 = vmul.f32 %v1915, %v1919
    %vm1921 = vweird.f32 %v1913
    %vm1922 = vweird.f32 %v1915
    %vm1923 = vmor %vm1921, %vm1922
    %v1924 = vsel %vm1923, %v1915, %v1920
    %v1925 = vrsqrt.pop %v1914
    %v1926 = vmul.f32 %v1925, %v1914
    %v1927 = vmul.f32 %v1926, %v1925
    %v1928 = vmul.f32 0.5, %v1927
    %v1929 = vsub.f32 1.5, %v1928
    %v1930 = vmul.f32 %v1925, %v1929
    %vm1931 = vweird.f32 %v1914
    %vm1932 = vweird.f32 %v1925
    %vm1933 = vmor %vm1931, %vm1932
    %v1934 = vsel %vm1933, %v1925, %v1930
    %v1935 = vmul.f32 %v1901, %v1924
    %v1936 = vmul.f32 %v1902, %v1934
    %v1937 = vperm.slane %v1892, 0
    %v1938 = vmul.f32 %v1935, %v1937
    %v1939 = vmul.f32 %v1936, %v1937
    %1941 = vrot.lane.b32.xlu0 %v1937, 96
    %v1942 = vpop.permute.xlu0 %1941
    %v1944 = vadd.f32 %v1938, %v1942
    %v1945 = vadd.f32 %v1939, %v1942
    %1946 = vst.msk [vmem:[#allocation2] sm:$0xff] %vm35, %v1944
    %1947 = vst.msk [vmem:[#allocation2 + $0x8] sm:$0xff] %vm35, %v1945
    // Predicated region
    $region10: #{tpu_custom_call.1} parent=1 // pred_check
      _
    $region11: #{tpu_custom_call.1} parent=1 // pred_check_branch
      %1949 = sbr.rel (0) target = $region13
    $region12: #{tpu_custom_call.1} parent=1 // pred_region
      %1951 = vsyncadd [#allocation3], 0
      %s1952 = sshll.u32 [#allocation2], 4
      %s1953 = int_to_ptr.vmem [resolvable:$true] %s1952
      %s1954 = sshll.u32 %s2, 4
      %s1955 = int_to_ptr.hbm [resolvable:$true] %s1954
      %1960 = dma.vmem_to_hbm [thread:$0]  %s1953, 256, %s1955, [#allocation3], 128, 128, 8
    $region13: #{tpu_custom_call.1} parent=1 // pred_fallthru
      _
    // Predicated region
    $region14: #{tpu_custom_call.1} parent=1 // pred_check
      _
    $region15: #{tpu_custom_call.1} parent=1 // pred_check_branch
      %1962 = sbr.rel (0) target = $region17
    $region16: #{tpu_custom_call.1} parent=1 // pred_region
      %1964 = dma.done [#allocation3], 256
    $region17: #{tpu_custom_call.1} parent=1 // pred_fallthru
      _
    %1965 = vsyncpa [#allocation3], 1

</llo_original>
